<compile_context>
chip_gen: v7x
topology: tpu7x:2x2x1
jax: 0.10.0
libtpu: 0.0.40
codegen_flags: <defaults>
</compile_context>

<pallas_src>
import jax
import jax.numpy as jnp
from jax.experimental import pallas as pl
from jax.experimental.pallas import tpu as pltpu

# ---- model hyperparameters (from the PyTorch module) ----
EMBEDDING_SIZE = 10
HIDDEN_SIZE = 8
INPUT_SIZE = 4      # vocab size for the embedding
NUM_CLASS = 4
NUM_LAYERS = 2      # fixed to 2 in the kernel below


def rnn_kernel(ids_ref,
               emb_ref,
               wih0_ref, whh0_ref, bih0_ref, bhh0_ref,
               wih1_ref, whh1_ref, bih1_ref, bhh1_ref,
               wfc_ref, bfc_ref,
               out_ref,
               hs_ref):
    """Embedding + 2-layer tanh RNN + Linear, fused, all in-kernel.

    ids_ref : [B*T, 1] int32   (token ids, row index = b*T + t, matches view(-1))
    emb_ref : [V, E]  f32      (embedding table)
    wih0    : [E, H]  f32      (layer-0 input weights, transposed)
    whh0    : [H, H]  f32
    bih0/bhh0 : [1, H] f32
    wih1    : [H, H]  f32      (layer-1 input weights, transposed)
    whh1    : [H, H]  f32
    bih1/bhh1 : [1, H] f32
    wfc     : [H, C]  f32      (fc weights, transposed)
    bfc     : [1, C]  f32
    out_ref : [B*T, C] f32     (flat output, row index = b*T + t)
    hs_ref  : [B, T, H] f32    VMEM scratch for top-layer hidden states
    """
    BT = ids_ref.shape[0]
    V, _ = emb_ref.shape
    H = whh0_ref.shape[0]
    B, T, _ = hs_ref.shape

    # ---- one-time folds (off the serial recurrence chain) ----
    emb_proj = jnp.dot(emb_ref[...], wih0_ref[...],
                       preferred_element_type=jnp.float32)            # [V, H]
    b0 = bih0_ref[...] + bhh0_ref[...]                                 # [1, H]
    w1s = jnp.concatenate([wih1_ref[...], whh1_ref[...]], axis=0)      # [2H, H]
    b1 = bih1_ref[...] + bhh1_ref[...]                                 # [1, H]
    whh0 = whh0_ref[...]
    wfc = wfc_ref[...]
    bfc = bfc_ref[...]

    # ---- embedding + layer-0 input projection for ALL tokens: ONE matmul ----
    # one-hot gather semantics (exact for ids in [0, V)).
    lane = jax.lax.broadcasted_iota(jnp.int32, (BT, V), 1)             # [BT, V]
    onehot = (ids_ref[...] == lane).astype(jnp.float32)                # [BT, V]
    x_all = jnp.dot(onehot, emb_proj,
                    preferred_element_type=jnp.float32) + b0           # [BT, H]
    x_all = x_all.reshape(B, T, H)                                     # tile-aligned split

    # ---- 2-layer RNN recurrence: 2 serialized matmuls per timestep ----
    h0 = jnp.zeros((B, H), jnp.float32)
    h1 = jnp.zeros((B, H), jnp.float32)
    for t in range(T):  # T is static and small -> unrolled
        h0 = jnp.tanh(x_all[:, t, :]
                      + jnp.dot(h0, whh0, preferred_element_type=jnp.float32))
        h1 = jnp.tanh(
            jnp.dot(jnp.concatenate([h0, h1], axis=1), w1s,
                    preferred_element_type=jnp.float32) + b1)
        hs_ref[:, t, :] = h1

    # ---- fused FC over all timesteps: one matmul + one lane-flat store ----
    h_flat = hs_ref[...].reshape(BT, H)                                # [BT, H]
    out_ref[...] = (jnp.dot(h_flat, wfc,
                            preferred_element_type=jnp.float32) + bfc)


def init_params(key):
    """Deterministic parameter init matching the PyTorch shapes."""
    ks = jax.random.split(key, 11)
    H, E, V, C = HIDDEN_SIZE, EMBEDDING_SIZE, INPUT_SIZE, NUM_CLASS
    s = 1.0 / jnp.sqrt(jnp.float32(H))

    params = dict(
        emb=jax.random.normal(ks[0], (V, E), jnp.float32),
        # RNN layer 0  (PyTorch stores W_ih0 as [H, E]; we keep transposed [E, H])
        wih0=jax.random.uniform(ks[1], (E, H), jnp.float32, -s, s),
        whh0=jax.random.uniform(ks[2], (H, H), jnp.float32, -s, s),
        bih0=jax.random.uniform(ks[3], (1, H), jnp.float32, -s, s),
        bhh0=jax.random.uniform(ks[4], (1, H), jnp.float32, -s, s),
        # RNN layer 1
        wih1=jax.random.uniform(ks[5], (H, H), jnp.float32, -s, s),
        whh1=jax.random.uniform(ks[6], (H, H), jnp.float32, -s, s),
        bih1=jax.random.uniform(ks[7], (1, H), jnp.float32, -s, s),
        bhh1=jax.random.uniform(ks[8], (1, H), jnp.float32, -s, s),
        # fc: PyTorch Linear weight [C, H]; stored transposed [H, C]
        wfc=jax.random.uniform(ks[9], (H, C), jnp.float32, -s, s),
        bfc=jax.random.uniform(ks[10], (1, C), jnp.float32, -s, s),
    )
    return params


@jax.jit
def model_forward(ids, params):
    B, T = ids.shape
    # flatten batch-first ids to [B*T, 1] (row-major => row index b*T + t,
    # exactly the ordering of the final x.view(-1, num_class))
    ids_flat = ids.reshape(B * T, 1).astype(jnp.int32)

    args = (ids_flat,
            params["emb"],
            params["wih0"], params["whh0"], params["bih0"], params["bhh0"],
            params["wih1"], params["whh1"], params["bih1"], params["bhh1"],
            params["wfc"], params["bfc"])

    vmem_spec = pl.BlockSpec(memory_space=pltpu.MemorySpace.VMEM)
    # NOTE(v7x): if B grows, add a 1-D grid over batch with
    # dimension_semantics=("parallel",) to use both TensorCores; at B=2 the
    # single-invocation, no-grid form is optimal on all generations.
    out = pl.pallas_call(
        rnn_kernel,
        out_shape=jax.ShapeDtypeStruct((B * T, NUM_CLASS), jnp.float32),
        in_specs=[vmem_spec] * len(args),
        out_specs=vmem_spec,
        scratch_shapes=[pltpu.VMEM((B, T, HIDDEN_SIZE), jnp.float32)],
    )(*args)
    return out                                   # already (B*T, num_class)


def reference_forward(ids, params):
    """Pure-JAX reference of the PyTorch forward, for a sanity check."""
    B, T = ids.shape
    emb = params["emb"][ids]                                        # [B, T, E]
    h0 = jnp.zeros((B, HIDDEN_SIZE), jnp.float32)
    h1 = jnp.zeros((B, HIDDEN_SIZE), jnp.float32)
    outs = []
    for t in range(T):
        x_t = emb[:, t, :]
        h0 = jnp.tanh(x_t @ params["wih0"] + params["bih0"]
                      + h0 @ params["whh0"] + params["bhh0"])
        h1 = jnp.tanh(h0 @ params["wih1"] + params["bih1"]
                      + h1 @ params["whh1"] + params["bhh1"])
        outs.append(h1 @ params["wfc"] + params["bfc"])
    out = jnp.stack(outs, axis=1)                                   # [B, T, C]
    return out.reshape(-1, NUM_CLASS)


if __name__ == "__main__":
    key = jax.random.PRNGKey(0)
    k_param, k_data = jax.random.split(key)

    params = init_params(k_param)

    # small input: batch=2, seq=8, token ids in [0, INPUT_SIZE)
    B, T = 2, 8
    ids = jax.random.randint(k_data, (B, T), 0, INPUT_SIZE, dtype=jnp.int32)

    out = model_forward(ids, params)
    out = jax.block_until_ready(out)

    ref = reference_forward(ids, params)
    assert out.shape == (B * T, NUM_CLASS), out.shape
    assert jnp.allclose(out, ref, atol=1e-4, rtol=1e-4), (
        f"max abs err {jnp.max(jnp.abs(out - ref))}")

    print("KERNEL_OK")
</pallas_src>

<mosaic_0001>
module attributes {stable_mosaic.version = 11 : i64} {
  func.func @rnn_kernel(%arg0: memref<16x1xi32, #tpu.memory_space<vmem>>, %arg1: memref<4x10xf32, #tpu.memory_space<vmem>>, %arg2: memref<10x8xf32, #tpu.memory_space<vmem>>, %arg3: memref<8x8xf32, #tpu.memory_space<vmem>>, %arg4: memref<1x8xf32, #tpu.memory_space<vmem>>, %arg5: memref<1x8xf32, #tpu.memory_space<vmem>>, %arg6: memref<8x8xf32, #tpu.memory_space<vmem>>, %arg7: memref<8x8xf32, #tpu.memory_space<vmem>>, %arg8: memref<1x8xf32, #tpu.memory_space<vmem>>, %arg9: memref<1x8xf32, #tpu.memory_space<vmem>>, %arg10: memref<8x4xf32, #tpu.memory_space<vmem>>, %arg11: memref<1x4xf32, #tpu.memory_space<vmem>>, %arg12: memref<16x4xf32, #tpu.memory_space<vmem>>, %arg13: memref<2x8x8xf32, #tpu.memory_space<vmem>>) attributes {dimension_semantics = [], scalar_prefetch = 0 : i64, scratch_operands = 1 : i64, tpu.core_type = #tpu.core_type<tc>} {
    %c0 = arith.constant 0 : index
    %c0_0 = arith.constant 0 : index
    %0 = vector.load %arg1[%c0, %c0_0] : memref<4x10xf32, #tpu.memory_space<vmem>>, vector<4x10xf32>
    %c0_1 = arith.constant 0 : index
    %c0_2 = arith.constant 0 : index
    %1 = vector.load %arg2[%c0_1, %c0_2] : memref<10x8xf32, #tpu.memory_space<vmem>>, vector<10x8xf32>
    %cst = arith.constant dense<0.000000e+00> : vector<4x8xf32>
    %2 = tpu.matmul %0, %1, %cst {dimension_numbers = #tpu.dot_dimension_numbers<[1], [0], [0], [1], [0, 0, 1, 1], [], []>} : vector<4x10xf32>, vector<10x8xf32>, vector<4x8xf32> -> vector<4x8xf32>
    %c0_3 = arith.constant 0 : index
    %c0_4 = arith.constant 0 : index
    %3 = vector.load %arg4[%c0_3, %c0_4] : memref<1x8xf32, #tpu.memory_space<vmem>>, vector<1x8xf32>
    %c0_5 = arith.constant 0 : index
    %c0_6 = arith.constant 0 : index
    %4 = vector.load %arg5[%c0_5, %c0_6] : memref<1x8xf32, #tpu.memory_space<vmem>>, vector<1x8xf32>
    %5 = arith.addf %3, %4 : vector<1x8xf32>
    %c0_7 = arith.constant 0 : index
    %c0_8 = arith.constant 0 : index
    %6 = vector.load %arg6[%c0_7, %c0_8] : memref<8x8xf32, #tpu.memory_space<vmem>>, vector<8x8xf32>
    %c0_9 = arith.constant 0 : index
    %c0_10 = arith.constant 0 : index
    %7 = vector.load %arg7[%c0_9, %c0_10] : memref<8x8xf32, #tpu.memory_space<vmem>>, vector<8x8xf32>
    %8 = tpu.concatenate %6, %7 in 0 : vector<8x8xf32>, vector<8x8xf32> -> vector<16x8xf32>
    %c0_11 = arith.constant 0 : index
    %c0_12 = arith.constant 0 : index
    %9 = vector.load %arg8[%c0_11, %c0_12] : memref<1x8xf32, #tpu.memory_space<vmem>>, vector<1x8xf32>
    %c0_13 = arith.constant 0 : index
    %c0_14 = arith.constant 0 : index
    %10 = vector.load %arg9[%c0_13, %c0_14] : memref<1x8xf32, #tpu.memory_space<vmem>>, vector<1x8xf32>
    %11 = arith.addf %9, %10 : vector<1x8xf32>
    %c0_15 = arith.constant 0 : index
    %c0_16 = arith.constant 0 : index
    %12 = vector.load %arg3[%c0_15, %c0_16] : memref<8x8xf32, #tpu.memory_space<vmem>>, vector<8x8xf32>
    %c0_17 = arith.constant 0 : index
    %c0_18 = arith.constant 0 : index
    %13 = vector.load %arg10[%c0_17, %c0_18] : memref<8x4xf32, #tpu.memory_space<vmem>>, vector<8x4xf32>
    %c0_19 = arith.constant 0 : index
    %c0_20 = arith.constant 0 : index
    %14 = vector.load %arg11[%c0_19, %c0_20] : memref<1x4xf32, #tpu.memory_space<vmem>>, vector<1x4xf32>
    %15 = tpu.iota {dimensions = array<i32: 1>} : vector<16x4xi32>
    %c0_21 = arith.constant 0 : index
    %c0_22 = arith.constant 0 : index
    %16 = vector.load %arg0[%c0_21, %c0_22] : memref<16x1xi32, #tpu.memory_space<vmem>>, vector<16x1xi32>
    %17 = vector.broadcast %16 : vector<16x1xi32> to vector<16x4xi32>
    %18 = arith.cmpi eq, %17, %15 : vector<16x4xi32>
    %19 = arith.extui %18 : vector<16x4xi1> to vector<16x4xi32>
    %20 = arith.sitofp %19 : vector<16x4xi32> to vector<16x4xf32>
    %cst_23 = arith.constant dense<0.000000e+00> : vector<16x8xf32>
    %21 = tpu.matmul %20, %2, %cst_23 {dimension_numbers = #tpu.dot_dimension_numbers<[1], [0], [0], [1], [0, 0, 1, 1], [], []>} : vector<16x4xf32>, vector<4x8xf32>, vector<16x8xf32> -> vector<16x8xf32>
    %22 = vector.broadcast %5 : vector<1x8xf32> to vector<16x8xf32>
    %23 = arith.addf %21, %22 : vector<16x8xf32>
    %24 = vector.shape_cast %23 : vector<16x8xf32> to vector<2x8x8xf32>
    %cst_24 = arith.constant 0.000000e+00 : f32
    %25 = vector.broadcast %cst_24 : f32 to vector<2x8xf32>
    %cst_25 = arith.constant 0.000000e+00 : f32
    %26 = vector.broadcast %cst_25 : f32 to vector<2x8xf32>
    %27 = vector.extract_strided_slice %24 {offsets = [0, 0, 0], sizes = [2, 1, 8], strides = [1, 1, 1]} : vector<2x8x8xf32> to vector<2x1x8xf32>
    %28 = vector.shape_cast %27 : vector<2x1x8xf32> to vector<2x8xf32>
    %cst_26 = arith.constant dense<0.000000e+00> : vector<2x8xf32>
    %29 = tpu.matmul %25, %12, %cst_26 {dimension_numbers = #tpu.dot_dimension_numbers<[1], [0], [0], [1], [0, 0, 1, 1], [], []>} : vector<2x8xf32>, vector<8x8xf32>, vector<2x8xf32> -> vector<2x8xf32>
    %30 = arith.addf %28, %29 : vector<2x8xf32>
    %31 = math.tanh %30 : vector<2x8xf32>
    %32 = tpu.concatenate %31, %26 in 1 : vector<2x8xf32>, vector<2x8xf32> -> vector<2x16xf32>
    %cst_27 = arith.constant dense<0.000000e+00> : vector<2x8xf32>
    %33 = tpu.matmul %32, %8, %cst_27 {dimension_numbers = #tpu.dot_dimension_numbers<[1], [0], [0], [1], [0, 0, 1, 1], [], []>} : vector<2x16xf32>, vector<16x8xf32>, vector<2x8xf32> -> vector<2x8xf32>
    %34 = vector.broadcast %11 : vector<1x8xf32> to vector<2x8xf32>
    %35 = arith.addf %33, %34 : vector<2x8xf32>
    %36 = math.tanh %35 : vector<2x8xf32>
    %c0_28 = arith.constant 0 : index
    %c0_29 = arith.constant 0 : index
    %c0_30 = arith.constant 0 : index
    %37 = vector.load %arg13[%c0_28, %c0_29, %c0_30] : memref<2x8x8xf32, #tpu.memory_space<vmem>>, vector<2x1x8xf32>
    %38 = vector.shape_cast %37 : vector<2x1x8xf32> to vector<2x8xf32>
    %39 = vector.shape_cast %36 : vector<2x8xf32> to vector<2x1x8xf32>
    tpu.vector_store %arg13[%c0_28, %c0_29, %c0_30], %39 {strides = array<i32>} : memref<2x8x8xf32, #tpu.memory_space<vmem>>, vector<2x1x8xf32>,
    %40 = vector.extract_strided_slice %24 {offsets = [0, 1, 0], sizes = [2, 1, 8], strides = [1, 1, 1]} : vector<2x8x8xf32> to vector<2x1x8xf32>
    %41 = vector.shape_cast %40 : vector<2x1x8xf32> to vector<2x8xf32>
    %cst_31 = arith.constant dense<0.000000e+00> : vector<2x8xf32>
    %42 = tpu.matmul %31, %12, %cst_31 {dimension_numbers = #tpu.dot_dimension_numbers<[1], [0], [0], [1], [0, 0, 1, 1], [], []>} : vector<2x8xf32>, vector<8x8xf32>, vector<2x8xf32> -> vector<2x8xf32>
    %43 = arith.addf %41, %42 : vector<2x8xf32>
    %44 = math.tanh %43 : vector<2x8xf32>
    %45 = tpu.concatenate %44, %36 in 1 : vector<2x8xf32>, vector<2x8xf32> -> vector<2x16xf32>
    %cst_32 = arith.constant dense<0.000000e+00> : vector<2x8xf32>
    %46 = tpu.matmul %45, %8, %cst_32 {dimension_numbers = #tpu.dot_dimension_numbers<[1], [0], [0], [1], [0, 0, 1, 1], [], []>} : vector<2x16xf32>, vector<16x8xf32>, vector<2x8xf32> -> vector<2x8xf32>
    %47 = vector.broadcast %11 : vector<1x8xf32> to vector<2x8xf32>
    %48 = arith.addf %46, %47 : vector<2x8xf32>
    %49 = math.tanh %48 : vector<2x8xf32>
    %c0_33 = arith.constant 0 : index
    %c1 = arith.constant 1 : index
    %c0_34 = arith.constant 0 : index
    %50 = vector.load %arg13[%c0_33, %c1, %c0_34] : memref<2x8x8xf32, #tpu.memory_space<vmem>>, vector<2x1x8xf32>
    %51 = vector.shape_cast %50 : vector<2x1x8xf32> to vector<2x8xf32>
    %52 = vector.shape_cast %49 : vector<2x8xf32> to vector<2x1x8xf32>
    tpu.vector_store %arg13[%c0_33, %c1, %c0_34], %52 {strides = array<i32>} : memref<2x8x8xf32, #tpu.memory_space<vmem>>, vector<2x1x8xf32>,
    %53 = vector.extract_strided_slice %24 {offsets = [0, 2, 0], sizes = [2, 1, 8], strides = [1, 1, 1]} : vector<2x8x8xf32> to vector<2x1x8xf32>
    %54 = vector.shape_cast %53 : vector<2x1x8xf32> to vector<2x8xf32>
    %cst_35 = arith.constant dense<0.000000e+00> : vector<2x8xf32>
    %55 = tpu.matmul %44, %12, %cst_35 {dimension_numbers = #tpu.dot_dimension_numbers<[1], [0], [0], [1], [0, 0, 1, 1], [], []>} : vector<2x8xf32>, vector<8x8xf32>, vector<2x8xf32> -> vector<2x8xf32>
    %56 = arith.addf %54, %55 : vector<2x8xf32>
    %57 = math.tanh %56 : vector<2x8xf32>
    %58 = tpu.concatenate %57, %49 in 1 : vector<2x8xf32>, vector<2x8xf32> -> vector<2x16xf32>
    %cst_36 = arith.constant dense<0.000000e+00> : vector<2x8xf32>
    %59 = tpu.matmul %58, %8, %cst_36 {dimension_numbers = #tpu.dot_dimension_numbers<[1], [0], [0], [1], [0, 0, 1, 1], [], []>} : vector<2x16xf32>, vector<16x8xf32>, vector<2x8xf32> -> vector<2x8xf32>
    %60 = vector.broadcast %11 : vector<1x8xf32> to vector<2x8xf32>
    %61 = arith.addf %59, %60 : vector<2x8xf32>
    %62 = math.tanh %61 : vector<2x8xf32>
    %c0_37 = arith.constant 0 : index
    %c2 = arith.constant 2 : index
    %c0_38 = arith.constant 0 : index
    %63 = vector.load %arg13[%c0_37, %c2, %c0_38] : memref<2x8x8xf32, #tpu.memory_space<vmem>>, vector<2x1x8xf32>
    %64 = vector.shape_cast %63 : vector<2x1x8xf32> to vector<2x8xf32>
    %65 = vector.shape_cast %62 : vector<2x8xf32> to vector<2x1x8xf32>
    tpu.vector_store %arg13[%c0_37, %c2, %c0_38], %65 {strides = array<i32>} : memref<2x8x8xf32, #tpu.memory_space<vmem>>, vector<2x1x8xf32>,
    %66 = vector.extract_strided_slice %24 {offsets = [0, 3, 0], sizes = [2, 1, 8], strides = [1, 1, 1]} : vector<2x8x8xf32> to vector<2x1x8xf32>
    %67 = vector.shape_cast %66 : vector<2x1x8xf32> to vector<2x8xf32>
    %cst_39 = arith.constant dense<0.000000e+00> : vector<2x8xf32>
    %68 = tpu.matmul %57, %12, %cst_39 {dimension_numbers = #tpu.dot_dimension_numbers<[1], [0], [0], [1], [0, 0, 1, 1], [], []>} : vector<2x8xf32>, vector<8x8xf32>, vector<2x8xf32> -> vector<2x8xf32>
    %69 = arith.addf %67, %68 : vector<2x8xf32>
    %70 = math.tanh %69 : vector<2x8xf32>
    %71 = tpu.concatenate %70, %62 in 1 : vector<2x8xf32>, vector<2x8xf32> -> vector<2x16xf32>
    %cst_40 = arith.constant dense<0.000000e+00> : vector<2x8xf32>
    %72 = tpu.matmul %71, %8, %cst_40 {dimension_numbers = #tpu.dot_dimension_numbers<[1], [0], [0], [1], [0, 0, 1, 1], [], []>} : vector<2x16xf32>, vector<16x8xf32>, vector<2x8xf32> -> vector<2x8xf32>
    %73 = vector.broadcast %11 : vector<1x8xf32> to vector<2x8xf32>
    %74 = arith.addf %72, %73 : vector<2x8xf32>
    %75 = math.tanh %74 : vector<2x8xf32>
    %c0_41 = arith.constant 0 : index
    %c3 = arith.constant 3 : index
    %c0_42 = arith.constant 0 : index
    %76 = vector.load %arg13[%c0_41, %c3, %c0_42] : memref<2x8x8xf32, #tpu.memory_space<vmem>>, vector<2x1x8xf32>
    %77 = vector.shape_cast %76 : vector<2x1x8xf32> to vector<2x8xf32>
    %78 = vector.shape_cast %75 : vector<2x8xf32> to vector<2x1x8xf32>
    tpu.vector_store %arg13[%c0_41, %c3, %c0_42], %78 {strides = array<i32>} : memref<2x8x8xf32, #tpu.memory_space<vmem>>, vector<2x1x8xf32>,
    %79 = vector.extract_strided_slice %24 {offsets = [0, 4, 0], sizes = [2, 1, 8], strides = [1, 1, 1]} : vector<2x8x8xf32> to vector<2x1x8xf32>
    %80 = vector.shape_cast %79 : vector<2x1x8xf32> to vector<2x8xf32>
    %cst_43 = arith.constant dense<0.000000e+00> : vector<2x8xf32>
    %81 = tpu.matmul %70, %12, %cst_43 {dimension_numbers = #tpu.dot_dimension_numbers<[1], [0], [0], [1], [0, 0, 1, 1], [], []>} : vector<2x8xf32>, vector<8x8xf32>, vector<2x8xf32> -> vector<2x8xf32>
    %82 = arith.addf %80, %81 : vector<2x8xf32>
    %83 = math.tanh %82 : vector<2x8xf32>
    %84 = tpu.concatenate %83, %75 in 1 : vector<2x8xf32>, vector<2x8xf32> -> vector<2x16xf32>
    %cst_44 = arith.constant dense<0.000000e+00> : vector<2x8xf32>
    %85 = tpu.matmul %84, %8, %cst_44 {dimension_numbers = #tpu.dot_dimension_numbers<[1], [0], [0], [1], [0, 0, 1, 1], [], []>} : vector<2x16xf32>, vector<16x8xf32>, vector<2x8xf32> -> vector<2x8xf32>
    %86 = vector.broadcast %11 : vector<1x8xf32> to vector<2x8xf32>
    %87 = arith.addf %85, %86 : vector<2x8xf32>
    %88 = math.tanh %87 : vector<2x8xf32>
    %c0_45 = arith.constant 0 : index
    %c4 = arith.constant 4 : index
    %c0_46 = arith.constant 0 : index
    %89 = vector.load %arg13[%c0_45, %c4, %c0_46] : memref<2x8x8xf32, #tpu.memory_space<vmem>>, vector<2x1x8xf32>
    %90 = vector.shape_cast %89 : vector<2x1x8xf32> to vector<2x8xf32>
    %91 = vector.shape_cast %88 : vector<2x8xf32> to vector<2x1x8xf32>
    tpu.vector_store %arg13[%c0_45, %c4, %c0_46], %91 {strides = array<i32>} : memref<2x8x8xf32, #tpu.memory_space<vmem>>, vector<2x1x8xf32>,
    %92 = vector.extract_strided_slice %24 {offsets = [0, 5, 0], sizes = [2, 1, 8], strides = [1, 1, 1]} : vector<2x8x8xf32> to vector<2x1x8xf32>
    %93 = vector.shape_cast %92 : vector<2x1x8xf32> to vector<2x8xf32>
    %cst_47 = arith.constant dense<0.000000e+00> : vector<2x8xf32>
    %94 = tpu.matmul %83, %12, %cst_47 {dimension_numbers = #tpu.dot_dimension_numbers<[1], [0], [0], [1], [0, 0, 1, 1], [], []>} : vector<2x8xf32>, vector<8x8xf32>, vector<2x8xf32> -> vector<2x8xf32>
    %95 = arith.addf %93, %94 : vector<2x8xf32>
    %96 = math.tanh %95 : vector<2x8xf32>
    %97 = tpu.concatenate %96, %88 in 1 : vector<2x8xf32>, vector<2x8xf32> -> vector<2x16xf32>
    %cst_48 = arith.constant dense<0.000000e+00> : vector<2x8xf32>
    %98 = tpu.matmul %97, %8, %cst_48 {dimension_numbers = #tpu.dot_dimension_numbers<[1], [0], [0], [1], [0, 0, 1, 1], [], []>} : vector<2x16xf32>, vector<16x8xf32>, vector<2x8xf32> -> vector<2x8xf32>
    %99 = vector.broadcast %11 : vector<1x8xf32> to vector<2x8xf32>
    %100 = arith.addf %98, %99 : vector<2x8xf32>
    %101 = math.tanh %100 : vector<2x8xf32>
    %c0_49 = arith.constant 0 : index
    %c5 = arith.constant 5 : index
    %c0_50 = arith.constant 0 : index
    %102 = vector.load %arg13[%c0_49, %c5, %c0_50] : memref<2x8x8xf32, #tpu.memory_space<vmem>>, vector<2x1x8xf32>
    %103 = vector.shape_cast %102 : vector<2x1x8xf32> to vector<2x8xf32>
    %104 = vector.shape_cast %101 : vector<2x8xf32> to vector<2x1x8xf32>
    tpu.vector_store %arg13[%c0_49, %c5, %c0_50], %104 {strides = array<i32>} : memref<2x8x8xf32, #tpu.memory_space<vmem>>, vector<2x1x8xf32>,
    %105 = vector.extract_strided_slice %24 {offsets = [0, 6, 0], sizes = [2, 1, 8], strides = [1, 1, 1]} : vector<2x8x8xf32> to vector<2x1x8xf32>
    %106 = vector.shape_cast %105 : vector<2x1x8xf32> to vector<2x8xf32>
    %cst_51 = arith.constant dense<0.000000e+00> : vector<2x8xf32>
    %107 = tpu.matmul %96, %12, %cst_51 {dimension_numbers = #tpu.dot_dimension_numbers<[1], [0], [0], [1], [0, 0, 1, 1], [], []>} : vector<2x8xf32>, vector<8x8xf32>, vector<2x8xf32> -> vector<2x8xf32>
    %108 = arith.addf %106, %107 : vector<2x8xf32>
    %109 = math.tanh %108 : vector<2x8xf32>
    %110 = tpu.concatenate %109, %101 in 1 : vector<2x8xf32>, vector<2x8xf32> -> vector<2x16xf32>
    %cst_52 = arith.constant dense<0.000000e+00> : vector<2x8xf32>
    %111 = tpu.matmul %110, %8, %cst_52 {dimension_numbers = #tpu.dot_dimension_numbers<[1], [0], [0], [1], [0, 0, 1, 1], [], []>} : vector<2x16xf32>, vector<16x8xf32>, vector<2x8xf32> -> vector<2x8xf32>
    %112 = vector.broadcast %11 : vector<1x8xf32> to vector<2x8xf32>
    %113 = arith.addf %111, %112 : vector<2x8xf32>
    %114 = math.tanh %113 : vector<2x8xf32>
    %c0_53 = arith.constant 0 : index
    %c6 = arith.constant 6 : index
    %c0_54 = arith.constant 0 : index
    %115 = vector.load %arg13[%c0_53, %c6, %c0_54] : memref<2x8x8xf32, #tpu.memory_space<vmem>>, vector<2x1x8xf32>
    %116 = vector.shape_cast %115 : vector<2x1x8xf32> to vector<2x8xf32>
    %117 = vector.shape_cast %114 : vector<2x8xf32> to vector<2x1x8xf32>
    tpu.vector_store %arg13[%c0_53, %c6, %c0_54], %117 {strides = array<i32>} : memref<2x8x8xf32, #tpu.memory_space<vmem>>, vector<2x1x8xf32>,
    %118 = vector.extract_strided_slice %24 {offsets = [0, 7, 0], sizes = [2, 1, 8], strides = [1, 1, 1]} : vector<2x8x8xf32> to vector<2x1x8xf32>
    %119 = vector.shape_cast %118 : vector<2x1x8xf32> to vector<2x8xf32>
    %cst_55 = arith.constant dense<0.000000e+00> : vector<2x8xf32>
    %120 = tpu.matmul %109, %12, %cst_55 {dimension_numbers = #tpu.dot_dimension_numbers<[1], [0], [0], [1], [0, 0, 1, 1], [], []>} : vector<2x8xf32>, vector<8x8xf32>, vector<2x8xf32> -> vector<2x8xf32>
    %121 = arith.addf %119, %120 : vector<2x8xf32>
    %122 = math.tanh %121 : vector<2x8xf32>
    %123 = tpu.concatenate %122, %114 in 1 : vector<2x8xf32>, vector<2x8xf32> -> vector<2x16xf32>
    %cst_56 = arith.constant dense<0.000000e+00> : vector<2x8xf32>
    %124 = tpu.matmul %123, %8, %cst_56 {dimension_numbers = #tpu.dot_dimension_numbers<[1], [0], [0], [1], [0, 0, 1, 1], [], []>} : vector<2x16xf32>, vector<16x8xf32>, vector<2x8xf32> -> vector<2x8xf32>
    %125 = vector.broadcast %11 : vector<1x8xf32> to vector<2x8xf32>
    %126 = arith.addf %124, %125 : vector<2x8xf32>
    %127 = math.tanh %126 : vector<2x8xf32>
    %c0_57 = arith.constant 0 : index
    %c7 = arith.constant 7 : index
    %c0_58 = arith.constant 0 : index
    %128 = vector.load %arg13[%c0_57, %c7, %c0_58] : memref<2x8x8xf32, #tpu.memory_space<vmem>>, vector<2x1x8xf32>
    %129 = vector.shape_cast %128 : vector<2x1x8xf32> to vector<2x8xf32>
    %130 = vector.shape_cast %127 : vector<2x8xf32> to vector<2x1x8xf32>
    tpu.vector_store %arg13[%c0_57, %c7, %c0_58], %130 {strides = array<i32>} : memref<2x8x8xf32, #tpu.memory_space<vmem>>, vector<2x1x8xf32>,
    %c0_59 = arith.constant 0 : index
    %c0_60 = arith.constant 0 : index
    %c0_61 = arith.constant 0 : index
    %131 = vector.load %arg13[%c0_59, %c0_60, %c0_61] : memref<2x8x8xf32, #tpu.memory_space<vmem>>, vector<2x8x8xf32>
    %132 = vector.shape_cast %131 : vector<2x8x8xf32> to vector<16x8xf32>
    %cst_62 = arith.constant dense<0.000000e+00> : vector<16x4xf32>
    %133 = tpu.matmul %132, %13, %cst_62 {dimension_numbers = #tpu.dot_dimension_numbers<[1], [0], [0], [1], [0, 0, 1, 1], [], []>} : vector<16x8xf32>, vector<8x4xf32>, vector<16x4xf32> -> vector<16x4xf32>
    %134 = vector.broadcast %14 : vector<1x4xf32> to vector<16x4xf32>
    %135 = arith.addf %133, %134 : vector<16x4xf32>
    %c0_63 = arith.constant 0 : index
    %c0_64 = arith.constant 0 : index
    %136 = vector.load %arg12[%c0_63, %c0_64] : memref<16x4xf32, #tpu.memory_space<vmem>>, vector<16x4xf32>
    tpu.vector_store %arg12[%c0_63, %c0_64], %135 {strides = array<i32>} : memref<16x4xf32, #tpu.memory_space<vmem>>, vector<16x4xf32>,
    return
  }
}

</mosaic_0001>

<llo_original>
// kernel: model_forward.1
$region0: #{model_forward.1}
  #allocation0 [shape = 'u32[]', space=smem, size = 0x4, offset = 0x4, fixed_abs, tag = 'smem constant byte address 0x4 - core index']
  #allocation1 [shape = 'u32[144,128]{1,0:T(1,128)}', space=vmem, size = 0x12000, scoped, tag = 'internal scratch']
  #allocation2 [shape = 'f32[2,8,8]{2,1,0:T(8,128)}', space=vmem, size = 0x2000, scoped, tag = 'scratch operand']
  %s0 = inlined_call_operand.vmem [shape: s32[16,1], index: 0, kind: input, shape index: {}]
  %s1 = inlined_call_operand.vmem [shape: f32[4,10], index: 1, kind: input, shape index: {}]
  %s2 = inlined_call_operand.vmem [shape: f32[10,8], index: 2, kind: input, shape index: {}]
  %s3 = inlined_call_operand.vmem [shape: f32[8,8], index: 3, kind: input, shape index: {}]
  %s4 = inlined_call_operand.vmem [shape: f32[1,8], index: 4, kind: input, shape index: {}]
  %s5 = inlined_call_operand.vmem [shape: f32[1,8], index: 5, kind: input, shape index: {}]
  %s6 = inlined_call_operand.vmem [shape: f32[8,8], index: 6, kind: input, shape index: {}]
  %s7 = inlined_call_operand.vmem [shape: f32[8,8], index: 7, kind: input, shape index: {}]
  %s8 = inlined_call_operand.vmem [shape: f32[1,8], index: 8, kind: input, shape index: {}]
  %s9 = inlined_call_operand.vmem [shape: f32[1,8], index: 9, kind: input, shape index: {}]
  %s10 = inlined_call_operand.vmem [shape: f32[8,4], index: 10, kind: input, shape index: {}]
  %s11 = inlined_call_operand.vmem [shape: f32[1,4], index: 11, kind: input, shape index: {}]
  %s12 = inlined_call_operand.vmem [shape: f32[16,4], index: 12, kind: output, shape index: {}]
  %s13 = sld [smem:[#allocation0]]
  $region58: #{model_forward.1} parent=0
    _
  %s15 = ssub.s32 1, %s13
  %s16 = scalar_select 0, %s15, %s13
  // Predicated region
  $region2: #{model_forward.1} parent=0 // pred_check
    _
  $region3: #{model_forward.1} parent=0 // pred_check_branch
    %18 = sbr.rel (0) target = $region5
  $region4: #{model_forward.1} parent=0 // pred_region
    _
  $region5: #{model_forward.1} parent=0 // pred_fallthru
    _
  // Predicated region
  $region6: #{model_forward.1} parent=0 // pred_check
    _
  $region7: #{model_forward.1} parent=0 // pred_check_branch
    %20 = sbr.rel (0) target = $region9
  $region8: #{model_forward.1} parent=0 // pred_region
    _
  $region9: #{model_forward.1} parent=0 // pred_fallthru
    _
  // Predicated region
  $region10: #{model_forward.1} parent=0 // pred_check
    _
  $region11: #{model_forward.1} parent=0 // pred_check_branch
    %22 = sbr.rel (0) target = $region13
  $region12: #{model_forward.1} parent=0 // pred_region
    _
  $region13: #{model_forward.1} parent=0 // pred_fallthru
    _
  // Predicated region
  $region14: #{model_forward.1} parent=0 // pred_check
    _
  $region15: #{model_forward.1} parent=0 // pred_check_branch
    %24 = sbr.rel (0) target = $region17
  $region16: #{model_forward.1} parent=0 // pred_region
    _
  $region17: #{model_forward.1} parent=0 // pred_fallthru
    _
  // Predicated region
  $region18: #{model_forward.1} parent=0 // pred_check
    _
  $region19: #{model_forward.1} parent=0 // pred_check_branch
    %26 = sbr.rel (0) target = $region21
  $region20: #{model_forward.1} parent=0 // pred_region
    _
  $region21: #{model_forward.1} parent=0 // pred_fallthru
    _
  // Predicated region
  $region22: #{model_forward.1} parent=0 // pred_check
    _
  $region23: #{model_forward.1} parent=0 // pred_check_branch
    %28 = sbr.rel (0) target = $region25
  $region24: #{model_forward.1} parent=0 // pred_region
    _
  $region25: #{model_forward.1} parent=0 // pred_fallthru
    _
  // Predicated region
  $region26: #{model_forward.1} parent=0 // pred_check
    _
  $region27: #{model_forward.1} parent=0 // pred_check_branch
    %30 = sbr.rel (0) target = $region29
  $region28: #{model_forward.1} parent=0 // pred_region
    _
  $region29: #{model_forward.1} parent=0 // pred_fallthru
    _
  // Predicated region
  $region30: #{model_forward.1} parent=0 // pred_check
    _
  $region31: #{model_forward.1} parent=0 // pred_check_branch
    %32 = sbr.rel (0) target = $region33
  $region32: #{model_forward.1} parent=0 // pred_region
    _
  $region33: #{model_forward.1} parent=0 // pred_fallthru
    _
  // Predicated region
  $region34: #{model_forward.1} parent=0 // pred_check
    _
  $region35: #{model_forward.1} parent=0 // pred_check_branch
    %34 = sbr.rel (0) target = $region37
  $region36: #{model_forward.1} parent=0 // pred_region
    _
  $region37: #{model_forward.1} parent=0 // pred_fallthru
    _
  // Predicated region
  $region38: #{model_forward.1} parent=0 // pred_check
    _
  $region39: #{model_forward.1} parent=0 // pred_check_branch
    %36 = sbr.rel (0) target = $region41
  $region40: #{model_forward.1} parent=0 // pred_region
    _
  $region41: #{model_forward.1} parent=0 // pred_fallthru
    _
  // Predicated region
  $region42: #{model_forward.1} parent=0 // pred_check
    _
  $region43: #{model_forward.1} parent=0 // pred_check_branch
    %38 = sbr.rel (0) target = $region45
  $region44: #{model_forward.1} parent=0 // pred_region
    _
  $region45: #{model_forward.1} parent=0 // pred_fallthru
    _
  // Predicated region
  $region46: #{model_forward.1} parent=0 // pred_check
    _
  $region47: #{model_forward.1} parent=0 // pred_check_branch
    %40 = sbr.rel (0) target = $region49
  $region48: #{model_forward.1} parent=0 // pred_region
    _
  $region49: #{model_forward.1} parent=0 // pred_fallthru
    _
  %v41 = vld [vmem:[%s1] sm:$0xf]
  %v42 = vld [vmem:[%s2] sm:$0xff]
  %v43 = vld [vmem:[%s2 + $0x8] sm:$0x3]
  %vm44 = vcmask 80896
  %v46 = vsel %vm44, %v41, 0
  %vm48 = vcmask 1041408
  %v50 = vsel %vm48, %v43, 0
  %52 = vmatprep.subr.mxu0 0.0
  %53 = vmatpush1.msra.mxu0 %v42
  %54 = vmatprep.subr.mxu0 0.0
  %55 = vmatpush1.msra.mxu0 %v50
  %56 = vmatprep.subr.mxu0 0.0
  %57 = vmatpush1.msra.mxu0 0.0
  %58 = vmatprep.subr.mxu0 0.0
  %59 = vmatpush1.msra.mxu0 0.0
  %60 = vmatprep.subr.mxu0 0.0
  %61 = vmatpush1.msra.mxu0 0.0
  %62 = vmatprep.subr.mxu0 0.0
  %63 = vmatpush1.msra.mxu0 0.0
  %64 = vmatprep.subr.mxu0 0.0
  %65 = vmatpush1.msra.mxu0 0.0
  %66 = vmatprep.subr.mxu0 0.0
  %67 = vmatpush1.msra.mxu0 0.0
  %68 = vmatprep.subr.mxu0 0.0
  %69 = vmatpush1.msra.mxu0 0.0
  %70 = vmatprep.subr.mxu0 0.0
  %71 = vmatpush1.msra.mxu0 0.0
  %72 = vmatprep.subr.mxu0 0.0
  %73 = vmatpush1.msra.mxu0 0.0
  %74 = vmatprep.subr.mxu0 0.0
  %75 = vmatpush1.msra.mxu0 0.0
  %76 = vmatprep.subr.mxu0 0.0
  %77 = vmatpush1.msra.mxu0 0.0
  %78 = vmatprep.subr.mxu0 0.0
  %79 = vmatpush1.msra.mxu0 0.0
  %80 = vmatprep.subr.mxu0 0.0
  %81 = vmatpush1.msra.mxu0 0.0
  %82 = vmatprep.subr.mxu0 0.0
  %83 = vmatpush1.msra.mxu0 0.0
  %84 = vmatprep.subr.mxu0 0.0
  %85 = vmatpush1.msra.mxu0 0.0
  %86 = vmatprep.subr.mxu0 0.0
  %87 = vmatpush1.msra.mxu0 0.0
  %88 = vmatprep.subr.mxu0 0.0
  %89 = vmatpush1.msra.mxu0 0.0
  %90 = vmatprep.subr.mxu0 0.0
  %91 = vmatpush1.msra.mxu0 0.0
  %92 = vmatprep.subr.mxu0 0.0
  %93 = vmatpush1.msra.mxu0 0.0
  %94 = vmatprep.subr.mxu0 0.0
  %95 = vmatpush1.msra.mxu0 0.0
  %96 = vmatprep.subr.mxu0 0.0
  %97 = vmatpush1.msra.mxu0 0.0
  %98 = vmatprep.subr.mxu0 0.0
  %99 = vmatpush1.msra.mxu0 0.0
  %100 = vmatprep.subr.mxu0 0.0
  %101 = vmatpush1.msra.mxu0 0.0
  %102 = vmatprep.subr.mxu0 0.0
  %103 = vmatpush1.msra.mxu0 0.0
  %104 = vmatprep.subr.mxu0 0.0
  %105 = vmatpush1.msra.mxu0 0.0
  %106 = vmatprep.subr.mxu0 0.0
  %107 = vmatpush1.msra.mxu0 0.0
  %108 = vmatprep.subr.mxu0 0.0
  %109 = vmatpush1.msra.mxu0 0.0
  %110 = vmatprep.subr.mxu0 0.0
  %111 = vmatpush1.msra.mxu0 0.0
  %112 = vmatprep.subr.mxu0 0.0
  %113 = vmatpush1.msra.mxu0 0.0
  %114 = vmatprep.subr.mxu0 0.0
  %115 = vmatpush1.msra.mxu0 0.0
  %116 = vmatprep.mubr.f32.mxu0 0.0
  %117 = vmatmul.mubr.f32.gmra.mrb[0].mxu0 %v46
  %v118 = vpop.f32.mrb[0].mxu0
  %v119 = vadd.f32 0.0, %v118
  %v120 = vpop.f32.mrb[0].mxu0
  %121 = vdwg.mxu0
  %v122 = vld [vmem:[%s4] sm:$0x1]
  %v123 = vld [vmem:[%s5] sm:$0x1]
  %v124 = vadd.f32 %v122, %v123
  %v125 = vld [vmem:[%s6] sm:$0xff]
  %v126 = vld [vmem:[%s7] sm:$0xff]
  %v127 = vld [vmem:[%s8] sm:$0x1]
  %v128 = vld [vmem:[%s9] sm:$0x1]
  %v129 = vadd.f32 %v127, %v128
  %v130 = vld [vmem:[%s3] sm:$0xff]
  %v131 = vld [vmem:[%s10] sm:$0xff]
  %v132 = vld [vmem:[%s11] sm:$0x1]
  %v133 = vlaneseq
  %v134 = vand.u32 %v133, 127
  %v135 = vld [vmem:[%s0] sm:$0xff]
  %v136 = vld [vmem:[%s0 + $0x8] sm:$0xff]
  %137 = vset.pattern.permute.xlu0 0
  %138 = vperm.xlu0 %137, %v135
  %v139 = vpop.permute.xlu0 %138
  %140 = vset.pattern.permute.xlu0 0
  %141 = vperm.xlu0 %140, %v136
  %v142 = vpop.permute.xlu0 %141
  %vm143 = vcmp.eq.s32.totalorder %v139, %v134
  %vm144 = vcmp.eq.s32.totalorder %v142, %v134
  %v145 = vsel %vm143, 1, 0
  %v146 = vsel %vm144, 1, 0
  %v147 = vcvt.s32.f32 %v145
  %v148 = vcvt.s32.f32 %v146
  %v150 = vlaneseq
  %v151 = vshrl.u32 %v150, 7
  %v152 = vsub.s32 0, %v151
  %v153 = vrot.slane %v124, %v152
  %vm155 = vcmask 31744
  %v157 = vsel %vm155, %v147, 0
  %v160 = vsel %vm155, %v148, 0
  %vm162 = vcmask 1043456
  %v164 = vsel %vm162, %v119, 0
  %166 = vmatprep.subr.mxu0 0.0
  %167 = vmatpush1.msra.mxu0 %v164
  %168 = vmatprep.subr.mxu0 0.0
  %169 = vmatpush1.msra.mxu0 0.0
  %170 = vmatprep.subr.mxu0 0.0
  %171 = vmatpush1.msra.mxu0 0.0
  %172 = vmatprep.subr.mxu0 0.0
  %173 = vmatpush1.msra.mxu0 0.0
  %174 = vmatprep.subr.mxu0 0.0
  %175 = vmatpush1.msra.mxu0 0.0
  %176 = vmatprep.subr.mxu0 0.0
  %177 = vmatpush1.msra.mxu0 0.0
  %178 = vmatprep.subr.mxu0 0.0
  %179 = vmatpush1.msra.mxu0 0.0
  %180 = vmatprep.subr.mxu0 0.0
  %181 = vmatpush1.msra.mxu0 0.0
  %182 = vmatprep.subr.mxu0 0.0
  %183 = vmatpush1.msra.mxu0 0.0
  %184 = vmatprep.subr.mxu0 0.0
  %185 = vmatpush1.msra.mxu0 0.0
  %186 = vmatprep.subr.mxu0 0.0
  %187 = vmatpush1.msra.mxu0 0.0
  %188 = vmatprep.subr.mxu0 0.0
  %189 = vmatpush1.msra.mxu0 0.0
  %190 = vmatprep.subr.mxu0 0.0
  %191 = vmatpush1.msra.mxu0 0.0
  %192 = vmatprep.subr.mxu0 0.0
  %193 = vmatpush1.msra.mxu0 0.0
  %194 = vmatprep.subr.mxu0 0.0
  %195 = vmatpush1.msra.mxu0 0.0
  %196 = vmatprep.subr.mxu0 0.0
  %197 = vmatpush1.msra.mxu0 0.0
  %198 = vmatprep.subr.mxu0 0.0
  %199 = vmatpush1.msra.mxu0 0.0
  %200 = vmatprep.subr.mxu0 0.0
  %201 = vmatpush1.msra.mxu0 0.0
  %202 = vmatprep.subr.mxu0 0.0
  %203 = vmatpush1.msra.mxu0 0.0
  %204 = vmatprep.subr.mxu0 0.0
  %205 = vmatpush1.msra.mxu0 0.0
  %206 = vmatprep.subr.mxu0 0.0
  %207 = vmatpush1.msra.mxu0 0.0
  %208 = vmatprep.subr.mxu0 0.0
  %209 = vmatpush1.msra.mxu0 0.0
  %210 = vmatprep.subr.mxu0 0.0
  %211 = vmatpush1.msra.mxu0 0.0
  %212 = vmatprep.subr.mxu0 0.0
  %213 = vmatpush1.msra.mxu0 0.0
  %214 = vmatprep.subr.mxu0 0.0
  %215 = vmatpush1.msra.mxu0 0.0
  %216 = vmatprep.subr.mxu0 0.0
  %217 = vmatpush1.msra.mxu0 0.0
  %218 = vmatprep.subr.mxu0 0.0
  %219 = vmatpush1.msra.mxu0 0.0
  %220 = vmatprep.subr.mxu0 0.0
  %221 = vmatpush1.msra.mxu0 0.0
  %222 = vmatprep.subr.mxu0 0.0
  %223 = vmatpush1.msra.mxu0 0.0
  %224 = vmatprep.subr.mxu0 0.0
  %225 = vmatpush1.msra.mxu0 0.0
  %226 = vmatprep.subr.mxu0 0.0
  %227 = vmatpush1.msra.mxu0 0.0
  %228 = vmatprep.subr.mxu0 0.0
  %229 = vmatpush1.msra.mxu0 0.0
  %230 = vmatprep.mubr.f32.mxu0 0.0
  %231 = vmatmul.mubr.f32.gmra.mrb[0].mxu0 %v157
  %v232 = vpop.f32.mrb[0].mxu0
  %v233 = vadd.f32 %v153, %v232
  %v234 = vpop.f32.mrb[0].mxu0
  %235 = vmatprep.mubr.f32.mxu0 0.0
  %236 = vmatmul.mubr.f32.gmra.mrb[0].mxu0 %v160
  %v237 = vpop.f32.mrb[0].mxu0
  %v238 = vadd.f32 %v153, %v237
  %v239 = vpop.f32.mrb[0].mxu0
  %240 = vdwg.mxu0
  %vm241 = vcmask 64512
  %v243 = vsel %vm241, 0.0, 0
  %245 = vmatprep.subr.mxu0 0.0
  %246 = vmatpush1.msra.mxu0 %v130
  %247 = vmatprep.subr.mxu0 0.0
  %248 = vmatpush1.msra.mxu0 0.0
  %249 = vmatprep.subr.mxu0 0.0
  %250 = vmatpush1.msra.mxu0 0.0
  %251 = vmatprep.subr.mxu0 0.0
  %252 = vmatpush1.msra.mxu0 0.0
  %253 = vmatprep.subr.mxu0 0.0
  %254 = vmatpush1.msra.mxu0 0.0
  %255 = vmatprep.subr.mxu0 0.0
  %256 = vmatpush1.msra.mxu0 0.0
  %257 = vmatprep.subr.mxu0 0.0
  %258 = vmatpush1.msra.mxu0 0.0
  %259 = vmatprep.subr.mxu0 0.0
  %260 = vmatpush1.msra.mxu0 0.0
  %261 = vmatprep.subr.mxu0 0.0
  %262 = vmatpush1.msra.mxu0 0.0
  %263 = vmatprep.subr.mxu0 0.0
  %264 = vmatpush1.msra.mxu0 0.0
  %265 = vmatprep.subr.mxu0 0.0
  %266 = vmatpush1.msra.mxu0 0.0
  %267 = vmatprep.subr.mxu0 0.0
  %268 = vmatpush1.msra.mxu0 0.0
  %269 = vmatprep.subr.mxu0 0.0
  %270 = vmatpush1.msra.mxu0 0.0
  %271 = vmatprep.subr.mxu0 0.0
  %272 = vmatpush1.msra.mxu0 0.0
  %273 = vmatprep.subr.mxu0 0.0
  %274 = vmatpush1.msra.mxu0 0.0
  %275 = vmatprep.subr.mxu0 0.0
  %276 = vmatpush1.msra.mxu0 0.0
  %277 = vmatprep.subr.mxu0 0.0
  %278 = vmatpush1.msra.mxu0 0.0
  %279 = vmatprep.subr.mxu0 0.0
  %280 = vmatpush1.msra.mxu0 0.0
  %281 = vmatprep.subr.mxu0 0.0
  %282 = vmatpush1.msra.mxu0 0.0
  %283 = vmatprep.subr.mxu0 0.0
  %284 = vmatpush1.msra.mxu0 0.0
  %285 = vmatprep.subr.mxu0 0.0
  %286 = vmatpush1.msra.mxu0 0.0
  %287 = vmatprep.subr.mxu0 0.0
  %288 = vmatpush1.msra.mxu0 0.0
  %289 = vmatprep.subr.mxu0 0.0
  %290 = vmatpush1.msra.mxu0 0.0
  %291 = vmatprep.subr.mxu0 0.0
  %292 = vmatpush1.msra.mxu0 0.0
  %293 = vmatprep.subr.mxu0 0.0
  %294 = vmatpush1.msra.mxu0 0.0
  %295 = vmatprep.subr.mxu0 0.0
  %296 = vmatpush1.msra.mxu0 0.0
  %297 = vmatprep.subr.mxu0 0.0
  %298 = vmatpush1.msra.mxu0 0.0
  %299 = vmatprep.subr.mxu0 0.0
  %300 = vmatpush1.msra.mxu0 0.0
  %301 = vmatprep.subr.mxu0 0.0
  %302 = vmatpush1.msra.mxu0 0.0
  %303 = vmatprep.subr.mxu0 0.0
  %304 = vmatpush1.msra.mxu0 0.0
  %305 = vmatprep.subr.mxu0 0.0
  %306 = vmatpush1.msra.mxu0 0.0
  %307 = vmatprep.subr.mxu0 0.0
  %308 = vmatpush1.msra.mxu0 0.0
  %309 = vmatprep.mubr.f32.mxu0 0.0
  %310 = vmatmul.mubr.f32.gmra.mrb[0].mxu0 %v243
  %v311 = vpop.f32.mrb[0].mxu0
  %v312 = vadd.f32 0.0, %v311
  %v313 = vpop.f32.mrb[0].mxu0
  %314 = vdwg.mxu0
  %v316 = vrot.slane %v312, 1
  %v319 = vadd.f32 %v233, %v312
  %v320 = vadd.f32 %v238, %v316
  %v321 = vtanh.pop %v319
  %v322 = vtanh.pop %v320
  %v325 = vrot.slane %v322, 7
  %vm326 = vcmask 1041409
  %v327 = vsel %vm326, %v325, %v321
  %v329 = vsel %vm241, %v327, 0.0
  %v331 = vlaneseq
  %v332 = vshrl.u32 %v331, 7
  %v333 = vsub.s32 0, %v332
  %v334 = vrot.slane %v129, %v333
  %vm336 = vcmask 130048
  %v338 = vsel %vm336, %v329, 0
  %340 = vmatprep.subr.mxu0 0.0
  %341 = vmatpush1.msra.mxu0 %v125
  %342 = vmatprep.subr.mxu0 0.0
  %343 = vmatpush1.msra.mxu0 %v126
  %344 = vmatprep.subr.mxu0 0.0
  %345 = vmatpush1.msra.mxu0 0.0
  %346 = vmatprep.subr.mxu0 0.0
  %347 = vmatpush1.msra.mxu0 0.0
  %348 = vmatprep.subr.mxu0 0.0
  %349 = vmatpush1.msra.mxu0 0.0
  %350 = vmatprep.subr.mxu0 0.0
  %351 = vmatpush1.msra.mxu0 0.0
  %352 = vmatprep.subr.mxu0 0.0
  %353 = vmatpush1.msra.mxu0 0.0
  %354 = vmatprep.subr.mxu0 0.0
  %355 = vmatpush1.msra.mxu0 0.0
  %356 = vmatprep.subr.mxu0 0.0
  %357 = vmatpush1.msra.mxu0 0.0
  %358 = vmatprep.subr.mxu0 0.0
  %359 = vmatpush1.msra.mxu0 0.0
  %360 = vmatprep.subr.mxu0 0.0
  %361 = vmatpush1.msra.mxu0 0.0
  %362 = vmatprep.subr.mxu0 0.0
  %363 = vmatpush1.msra.mxu0 0.0
  %364 = vmatprep.subr.mxu0 0.0
  %365 = vmatpush1.msra.mxu0 0.0
  %366 = vmatprep.subr.mxu0 0.0
  %367 = vmatpush1.msra.mxu0 0.0
  %368 = vmatprep.subr.mxu0 0.0
  %369 = vmatpush1.msra.mxu0 0.0
  %370 = vmatprep.subr.mxu0 0.0
  %371 = vmatpush1.msra.mxu0 0.0
  %372 = vmatprep.subr.mxu0 0.0
  %373 = vmatpush1.msra.mxu0 0.0
  %374 = vmatprep.subr.mxu0 0.0
  %375 = vmatpush1.msra.mxu0 0.0
  %376 = vmatprep.subr.mxu0 0.0
  %377 = vmatpush1.msra.mxu0 0.0
  %378 = vmatprep.subr.mxu0 0.0
  %379 = vmatpush1.msra.mxu0 0.0
  %380 = vmatprep.subr.mxu0 0.0
  %381 = vmatpush1.msra.mxu0 0.0
  %382 = vmatprep.subr.mxu0 0.0
  %383 = vmatpush1.msra.mxu0 0.0
  %384 = vmatprep.subr.mxu0 0.0
  %385 = vmatpush1.msra.mxu0 0.0
  %386 = vmatprep.subr.mxu0 0.0
  %387 = vmatpush1.msra.mxu0 0.0
  %388 = vmatprep.subr.mxu0 0.0
  %389 = vmatpush1.msra.mxu0 0.0
  %390 = vmatprep.subr.mxu0 0.0
  %391 = vmatpush1.msra.mxu0 0.0
  %392 = vmatprep.subr.mxu0 0.0
  %393 = vmatpush1.msra.mxu0 0.0
  %394 = vmatprep.subr.mxu0 0.0
  %395 = vmatpush1.msra.mxu0 0.0
  %396 = vmatprep.subr.mxu0 0.0
  %397 = vmatpush1.msra.mxu0 0.0
  %398 = vmatprep.subr.mxu0 0.0
  %399 = vmatpush1.msra.mxu0 0.0
  %400 = vmatprep.subr.mxu0 0.0
  %401 = vmatpush1.msra.mxu0 0.0
  %402 = vmatprep.subr.mxu0 0.0
  %403 = vmatpush1.msra.mxu0 0.0
  %404 = vmatprep.mubr.f32.mxu0 0.0
  %405 = vmatmul.mubr.f32.gmra.mrb[0].mxu0 %v338
  %v406 = vpop.f32.mrb[0].mxu0
  %v407 = vadd.f32 %v334, %v406
  %v408 = vpop.f32.mrb[0].mxu0
  %409 = vdwg.mxu0
  %v410 = vtanh.pop %v407
  %v413 = vunpack.c.l.s4 1966171168
  %v414 = vunpack.c.0.s8 %v413
  %v415 = vlaneseq
  %v416 = vshrl.u32 %v415, 7
  %v417 = vsub.s32 %v414, %v416
  %v418 = vrot.slane %v410, %v417
  %v419 = vcombine.high %v418, %v418
  %v421 = vunpack.c.l.s4 1966171168
  %v422 = vunpack.c.0.s8 %v421
  %v423 = vlaneseq
  %v424 = vshrl.u32 %v423, 7
  %v425 = vsub.s32 %v422, %v424
  %v426 = vrot.slane %v418, %v425
  %v428 = vunpack.c.l.s4 1966171168
  %v429 = vunpack.c.0.s8 %v428
  %v430 = vlaneseq
  %v431 = vshrl.u32 %v430, 7
  %v432 = vsub.s32 %v429, %v431
  %v433 = vrot.slane %v419, %v432
  %vm436 = vcmask 57344
  %437 = vst.msk [vmem:[#allocation2] sm:$0x1] %vm436, %v426
  %438 = vst.msk [vmem:[#allocation2 + $0x8] sm:$0x1] %vm436, %v433
  %v439 = vsel %vm241, %v327, 0
  %441 = vmatprep.subr.mxu0 0.0
  %442 = vmatpush1.msra.mxu0 %v130
  %443 = vmatprep.subr.mxu0 0.0
  %444 = vmatpush1.msra.mxu0 0.0
  %445 = vmatprep.subr.mxu0 0.0
  %446 = vmatpush1.msra.mxu0 0.0
  %447 = vmatprep.subr.mxu0 0.0
  %448 = vmatpush1.msra.mxu0 0.0
  %449 = vmatprep.subr.mxu0 0.0
  %450 = vmatpush1.msra.mxu0 0.0
  %451 = vmatprep.subr.mxu0 0.0
  %452 = vmatpush1.msra.mxu0 0.0
  %453 = vmatprep.subr.mxu0 0.0
  %454 = vmatpush1.msra.mxu0 0.0
  %455 = vmatprep.subr.mxu0 0.0
  %456 = vmatpush1.msra.mxu0 0.0
  %457 = vmatprep.subr.mxu0 0.0
  %458 = vmatpush1.msra.mxu0 0.0
  %459 = vmatprep.subr.mxu0 0.0
  %460 = vmatpush1.msra.mxu0 0.0
  %461 = vmatprep.subr.mxu0 0.0
  %462 = vmatpush1.msra.mxu0 0.0
  %463 = vmatprep.subr.mxu0 0.0
  %464 = vmatpush1.msra.mxu0 0.0
  %465 = vmatprep.subr.mxu0 0.0
  %466 = vmatpush1.msra.mxu0 0.0
  %467 = vmatprep.subr.mxu0 0.0
  %468 = vmatpush1.msra.mxu0 0.0
  %469 = vmatprep.subr.mxu0 0.0
  %470 = vmatpush1.msra.mxu0 0.0
  %471 = vmatprep.subr.mxu0 0.0
  %472 = vmatpush1.msra.mxu0 0.0
  %473 = vmatprep.subr.mxu0 0.0
  %474 = vmatpush1.msra.mxu0 0.0
  %475 = vmatprep.subr.mxu0 0.0
  %476 = vmatpush1.msra.mxu0 0.0
  %477 = vmatprep.subr.mxu0 0.0
  %478 = vmatpush1.msra.mxu0 0.0
  %479 = vmatprep.subr.mxu0 0.0
  %480 = vmatpush1.msra.mxu0 0.0
  %481 = vmatprep.subr.mxu0 0.0
  %482 = vmatpush1.msra.mxu0 0.0
  %483 = vmatprep.subr.mxu0 0.0
  %484 = vmatpush1.msra.mxu0 0.0
  %485 = vmatprep.subr.mxu0 0.0
  %486 = vmatpush1.msra.mxu0 0.0
  %487 = vmatprep.subr.mxu0 0.0
  %488 = vmatpush1.msra.mxu0 0.0
  %489 = vmatprep.subr.mxu0 0.0
  %490 = vmatpush1.msra.mxu0 0.0
  %491 = vmatprep.subr.mxu0 0.0
  %492 = vmatpush1.msra.mxu0 0.0
  %493 = vmatprep.subr.mxu0 0.0
  %494 = vmatpush1.msra.mxu0 0.0
  %495 = vmatprep.subr.mxu0 0.0
  %496 = vmatpush1.msra.mxu0 0.0
  %497 = vmatprep.subr.mxu0 0.0
  %498 = vmatpush1.msra.mxu0 0.0
  %499 = vmatprep.subr.mxu0 0.0
  %500 = vmatpush1.msra.mxu0 0.0
  %501 = vmatprep.subr.mxu0 0.0
  %502 = vmatpush1.msra.mxu0 0.0
  %503 = vmatprep.subr.mxu0 0.0
  %504 = vmatpush1.msra.mxu0 0.0
  %505 = vmatprep.mubr.f32.mxu0 0.0
  %506 = vmatmul.mubr.f32.gmra.mrb[0].mxu0 %v439
  %v507 = vpop.f32.mrb[0].mxu0
  %v508 = vadd.f32 0.0, %v507
  %v509 = vpop.f32.mrb[0].mxu0
  %510 = vdwg.mxu0
  %v512 = vrot.slane %v508, 7
  %v515 = vadd.f32 %v233, %v512
  %v516 = vadd.f32 %v238, %v508
  %v517 = vtanh.pop %v515
  %v518 = vtanh.pop %v516
  %v521 = vrot.slane %v518, 7
  %vm522 = vcmask 1042434
  %v523 = vsel %vm522, %v521, %v517
  %v525 = vrot.slane %v410, 7
  %526 = vrot.lane.b32.xlu0 %v525, 8
  %v527 = vpop.permute.xlu0 %526
  %v529 = vsel %vm241, %v523, %v527
  %v531 = vrot.slane %v529, 1
  %v532 = vsel %vm336, %v531, 0
  %534 = vmatprep.subr.mxu0 0.0
  %535 = vmatpush1.msra.mxu0 %v125
  %536 = vmatprep.subr.mxu0 0.0
  %537 = vmatpush1.msra.mxu0 %v126
  %538 = vmatprep.subr.mxu0 0.0
  %539 = vmatpush1.msra.mxu0 0.0
  %540 = vmatprep.subr.mxu0 0.0
  %541 = vmatpush1.msra.mxu0 0.0
  %542 = vmatprep.subr.mxu0 0.0
  %543 = vmatpush1.msra.mxu0 0.0
  %544 = vmatprep.subr.mxu0 0.0
  %545 = vmatpush1.msra.mxu0 0.0
  %546 = vmatprep.subr.mxu0 0.0
  %547 = vmatpush1.msra.mxu0 0.0
  %548 = vmatprep.subr.mxu0 0.0
  %549 = vmatpush1.msra.mxu0 0.0
  %550 = vmatprep.subr.mxu0 0.0
  %551 = vmatpush1.msra.mxu0 0.0
  %552 = vmatprep.subr.mxu0 0.0
  %553 = vmatpush1.msra.mxu0 0.0
  %554 = vmatprep.subr.mxu0 0.0
  %555 = vmatpush1.msra.mxu0 0.0
  %556 = vmatprep.subr.mxu0 0.0
  %557 = vmatpush1.msra.mxu0 0.0
  %558 = vmatprep.subr.mxu0 0.0
  %559 = vmatpush1.msra.mxu0 0.0
  %560 = vmatprep.subr.mxu0 0.0
  %561 = vmatpush1.msra.mxu0 0.0
  %562 = vmatprep.subr.mxu0 0.0
  %563 = vmatpush1.msra.mxu0 0.0
  %564 = vmatprep.subr.mxu0 0.0
  %565 = vmatpush1.msra.mxu0 0.0
  %566 = vmatprep.subr.mxu0 0.0
  %567 = vmatpush1.msra.mxu0 0.0
  %568 = vmatprep.subr.mxu0 0.0
  %569 = vmatpush1.msra.mxu0 0.0
  %570 = vmatprep.subr.mxu0 0.0
  %571 = vmatpush1.msra.mxu0 0.0
  %572 = vmatprep.subr.mxu0 0.0
  %573 = vmatpush1.msra.mxu0 0.0
  %574 = vmatprep.subr.mxu0 0.0
  %575 = vmatpush1.msra.mxu0 0.0
  %576 = vmatprep.subr.mxu0 0.0
  %577 = vmatpush1.msra.mxu0 0.0
  %578 = vmatprep.subr.mxu0 0.0
  %579 = vmatpush1.msra.mxu0 0.0
  %580 = vmatprep.subr.mxu0 0.0
  %581 = vmatpush1.msra.mxu0 0.0
  %582 = vmatprep.subr.mxu0 0.0
  %583 = vmatpush1.msra.mxu0 0.0
  %584 = vmatprep.subr.mxu0 0.0
  %585 = vmatpush1.msra.mxu0 0.0
  %586 = vmatprep.subr.mxu0 0.0
  %587 = vmatpush1.msra.mxu0 0.0
  %588 = vmatprep.subr.mxu0 0.0
  %589 = vmatpush1.msra.mxu0 0.0
  %590 = vmatprep.subr.mxu0 0.0
  %591 = vmatpush1.msra.mxu0 0.0
  %592 = vmatprep.subr.mxu0 0.0
  %593 = vmatpush1.msra.mxu0 0.0
  %594 = vmatprep.subr.mxu0 0.0
  %595 = vmatpush1.msra.mxu0 0.0
  %596 = vmatprep.subr.mxu0 0.0
  %597 = vmatpush1.msra.mxu0 0.0
  %598 = vmatprep.mubr.f32.mxu0 0.0
  %599 = vmatmul.mubr.f32.gmra.mrb[0].mxu0 %v532
  %v600 = vpop.f32.mrb[0].mxu0
  %v601 = vadd.f32 %v334, %v600
  %v602 = vpop.f32.mrb[0].mxu0
  %603 = vdwg.mxu0
  %v604 = vtanh.pop %v601
  %v607 = vunpack.c.l.s4 1966171168
  %v608 = vunpack.c.0.s8 %v607
  %v609 = vlaneseq
  %v610 = vshrl.u32 %v609, 7
  %v611 = vsub.s32 %v608, %v610
  %v612 = vrot.slane %v604, %v611
  %v613 = vcombine.high %v612, %v612
  %v615 = vunpack.c.l.s4 1966171168
  %v616 = vunpack.c.0.s8 %v615
  %v617 = vlaneseq
  %v618 = vshrl.u32 %v617, 7
  %v619 = vsub.s32 %v616, %v618
  %v620 = vrot.slane %v612, %v619
  %v622 = vunpack.c.l.s4 1966171168
  %v623 = vunpack.c.0.s8 %v622
  %v624 = vlaneseq
  %v625 = vshrl.u32 %v624, 7
  %v626 = vsub.s32 %v623, %v625
  %v627 = vrot.slane %v613, %v626
  %630 = vst.msk [vmem:[#allocation2 + $0x1] sm:$0x1] %vm436, %v620
  %631 = vst.msk [vmem:[#allocation2 + $0x9] sm:$0x1] %vm436, %v627
  %v632 = vrot.slane %v517, 1
  %v633 = vsel %vm326, %v518, %v632
  %v634 = vsel %vm241, %v633, 0
  %636 = vmatprep.subr.mxu0 0.0
  %637 = vmatpush1.msra.mxu0 %v130
  %638 = vmatprep.subr.mxu0 0.0
  %639 = vmatpush1.msra.mxu0 0.0
  %640 = vmatprep.subr.mxu0 0.0
  %641 = vmatpush1.msra.mxu0 0.0
  %642 = vmatprep.subr.mxu0 0.0
  %643 = vmatpush1.msra.mxu0 0.0
  %644 = vmatprep.subr.mxu0 0.0
  %645 = vmatpush1.msra.mxu0 0.0
  %646 = vmatprep.subr.mxu0 0.0
  %647 = vmatpush1.msra.mxu0 0.0
  %648 = vmatprep.subr.mxu0 0.0
  %649 = vmatpush1.msra.mxu0 0.0
  %650 = vmatprep.subr.mxu0 0.0
  %651 = vmatpush1.msra.mxu0 0.0
  %652 = vmatprep.subr.mxu0 0.0
  %653 = vmatpush1.msra.mxu0 0.0
  %654 = vmatprep.subr.mxu0 0.0
  %655 = vmatpush1.msra.mxu0 0.0
  %656 = vmatprep.subr.mxu0 0.0
  %657 = vmatpush1.msra.mxu0 0.0
  %658 = vmatprep.subr.mxu0 0.0
  %659 = vmatpush1.msra.mxu0 0.0
  %660 = vmatprep.subr.mxu0 0.0
  %661 = vmatpush1.msra.mxu0 0.0
  %662 = vmatprep.subr.mxu0 0.0
  %663 = vmatpush1.msra.mxu0 0.0
  %664 = vmatprep.subr.mxu0 0.0
  %665 = vmatpush1.msra.mxu0 0.0
  %666 = vmatprep.subr.mxu0 0.0
  %667 = vmatpush1.msra.mxu0 0.0
  %668 = vmatprep.subr.mxu0 0.0
  %669 = vmatpush1.msra.mxu0 0.0
  %670 = vmatprep.subr.mxu0 0.0
  %671 = vmatpush1.msra.mxu0 0.0
  %672 = vmatprep.subr.mxu0 0.0
  %673 = vmatpush1.msra.mxu0 0.0
  %674 = vmatprep.subr.mxu0 0.0
  %675 = vmatpush1.msra.mxu0 0.0
  %676 = vmatprep.subr.mxu0 0.0
  %677 = vmatpush1.msra.mxu0 0.0
  %678 = vmatprep.subr.mxu0 0.0
  %679 = vmatpush1.msra.mxu0 0.0
  %680 = vmatprep.subr.mxu0 0.0
  %681 = vmatpush1.msra.mxu0 0.0
  %682 = vmatprep.subr.mxu0 0.0
  %683 = vmatpush1.msra.mxu0 0.0
  %684 = vmatprep.subr.mxu0 0.0
  %685 = vmatpush1.msra.mxu0 0.0
  %686 = vmatprep.subr.mxu0 0.0
  %687 = vmatpush1.msra.mxu0 0.0
  %688 = vmatprep.subr.mxu0 0.0
  %689 = vmatpush1.msra.mxu0 0.0
  %690 = vmatprep.subr.mxu0 0.0
  %691 = vmatpush1.msra.mxu0 0.0
  %692 = vmatprep.subr.mxu0 0.0
  %693 = vmatpush1.msra.mxu0 0.0
  %694 = vmatprep.subr.mxu0 0.0
  %695 = vmatpush1.msra.mxu0 0.0
  %696 = vmatprep.subr.mxu0 0.0
  %697 = vmatpush1.msra.mxu0 0.0
  %698 = vmatprep.subr.mxu0 0.0
  %699 = vmatpush1.msra.mxu0 0.0
  %700 = vmatprep.mubr.f32.mxu0 0.0
  %701 = vmatmul.mubr.f32.gmra.mrb[0].mxu0 %v634
  %v702 = vpop.f32.mrb[0].mxu0
  %v703 = vadd.f32 0.0, %v702
  %v704 = vpop.f32.mrb[0].mxu0
  %705 = vdwg.mxu0
  %v707 = vrot.slane %v703, 6
  %v708 = vrot.slane %v703, 7
  %v711 = vadd.f32 %v233, %v707
  %v712 = vadd.f32 %v238, %v708
  %v713 = vtanh.pop %v711
  %v714 = vtanh.pop %v712
  %v717 = vrot.slane %v714, 7
  %vm718 = vcmask 1043459
  %v719 = vsel %vm718, %v717, %v713
  %v721 = vrot.slane %v604, 6
  %722 = vrot.lane.b32.xlu0 %v721, 8
  %v723 = vpop.permute.xlu0 %722
  %v725 = vsel %vm241, %v719, %v723
  %v727 = vrot.slane %v725, 2
  %v728 = vsel %vm336, %v727, 0
  %730 = vmatprep.subr.mxu0 0.0
  %731 = vmatpush1.msra.mxu0 %v125
  %732 = vmatprep.subr.mxu0 0.0
  %733 = vmatpush1.msra.mxu0 %v126
  %734 = vmatprep.subr.mxu0 0.0
  %735 = vmatpush1.msra.mxu0 0.0
  %736 = vmatprep.subr.mxu0 0.0
  %737 = vmatpush1.msra.mxu0 0.0
  %738 = vmatprep.subr.mxu0 0.0
  %739 = vmatpush1.msra.mxu0 0.0
  %740 = vmatprep.subr.mxu0 0.0
  %741 = vmatpush1.msra.mxu0 0.0
  %742 = vmatprep.subr.mxu0 0.0
  %743 = vmatpush1.msra.mxu0 0.0
  %744 = vmatprep.subr.mxu0 0.0
  %745 = vmatpush1.msra.mxu0 0.0
  %746 = vmatprep.subr.mxu0 0.0
  %747 = vmatpush1.msra.mxu0 0.0
  %748 = vmatprep.subr.mxu0 0.0
  %749 = vmatpush1.msra.mxu0 0.0
  %750 = vmatprep.subr.mxu0 0.0
  %751 = vmatpush1.msra.mxu0 0.0
  %752 = vmatprep.subr.mxu0 0.0
  %753 = vmatpush1.msra.mxu0 0.0
  %754 = vmatprep.subr.mxu0 0.0
  %755 = vmatpush1.msra.mxu0 0.0
  %756 = vmatprep.subr.mxu0 0.0
  %757 = vmatpush1.msra.mxu0 0.0
  %758 = vmatprep.subr.mxu0 0.0
  %759 = vmatpush1.msra.mxu0 0.0
  %760 = vmatprep.subr.mxu0 0.0
  %761 = vmatpush1.msra.mxu0 0.0
  %762 = vmatprep.subr.mxu0 0.0
  %763 = vmatpush1.msra.mxu0 0.0
  %764 = vmatprep.subr.mxu0 0.0
  %765 = vmatpush1.msra.mxu0 0.0
  %766 = vmatprep.subr.mxu0 0.0
  %767 = vmatpush1.msra.mxu0 0.0
  %768 = vmatprep.subr.mxu0 0.0
  %769 = vmatpush1.msra.mxu0 0.0
  %770 = vmatprep.subr.mxu0 0.0
  %771 = vmatpush1.msra.mxu0 0.0
  %772 = vmatprep.subr.mxu0 0.0
  %773 = vmatpush1.msra.mxu0 0.0
  %774 = vmatprep.subr.mxu0 0.0
  %775 = vmatpush1.msra.mxu0 0.0
  %776 = vmatprep.subr.mxu0 0.0
  %777 = vmatpush1.msra.mxu0 0.0
  %778 = vmatprep.subr.mxu0 0.0
  %779 = vmatpush1.msra.mxu0 0.0
  %780 = vmatprep.subr.mxu0 0.0
  %781 = vmatpush1.msra.mxu0 0.0
  %782 = vmatprep.subr.mxu0 0.0
  %783 = vmatpush1.msra.mxu0 0.0
  %784 = vmatprep.subr.mxu0 0.0
  %785 = vmatpush1.msra.mxu0 0.0
  %786 = vmatprep.subr.mxu0 0.0
  %787 = vmatpush1.msra.mxu0 0.0
  %788 = vmatprep.subr.mxu0 0.0
  %789 = vmatpush1.msra.mxu0 0.0
  %790 = vmatprep.subr.mxu0 0.0
  %791 = vmatpush1.msra.mxu0 0.0
  %792 = vmatprep.subr.mxu0 0.0
  %793 = vmatpush1.msra.mxu0 0.0
  %794 = vmatprep.mubr.f32.mxu0 0.0
  %795 = vmatmul.mubr.f32.gmra.mrb[0].mxu0 %v728
  %v796 = vpop.f32.mrb[0].mxu0
  %v797 = vadd.f32 %v334, %v796
  %v798 = vpop.f32.mrb[0].mxu0
  %799 = vdwg.mxu0
  %v800 = vtanh.pop %v797
  %v803 = vunpack.c.l.s4 1966171168
  %v804 = vunpack.c.0.s8 %v803
  %v805 = vlaneseq
  %v806 = vshrl.u32 %v805, 7
  %v807 = vsub.s32 %v804, %v806
  %v808 = vrot.slane %v800, %v807
  %v809 = vcombine.high %v808, %v808
  %v811 = vunpack.c.l.s4 1966171168
  %v812 = vunpack.c.0.s8 %v811
  %v813 = vlaneseq
  %v814 = vshrl.u32 %v813, 7
  %v815 = vsub.s32 %v812, %v814
  %v816 = vrot.slane %v808, %v815
  %v818 = vunpack.c.l.s4 1966171168
  %v819 = vunpack.c.0.s8 %v818
  %v820 = vlaneseq
  %v821 = vshrl.u32 %v820, 7
  %v822 = vsub.s32 %v819, %v821
  %v823 = vrot.slane %v809, %v822
  %826 = vst.msk [vmem:[#allocation2 + $0x2] sm:$0x1] %vm436, %v816
  %827 = vst.msk [vmem:[#allocation2 + $0xa] sm:$0x1] %vm436, %v823
  %v828 = vrot.slane %v713, 2
  %v829 = vrot.slane %v714, 1
  %v830 = vsel %vm326, %v829, %v828
  %v831 = vsel %vm241, %v830, 0
  %833 = vmatprep.subr.mxu0 0.0
  %834 = vmatpush1.msra.mxu0 %v130
  %835 = vmatprep.subr.mxu0 0.0
  %836 = vmatpush1.msra.mxu0 0.0
  %837 = vmatprep.subr.mxu0 0.0
  %838 = vmatpush1.msra.mxu0 0.0
  %839 = vmatprep.subr.mxu0 0.0
  %840 = vmatpush1.msra.mxu0 0.0
  %841 = vmatprep.subr.mxu0 0.0
  %842 = vmatpush1.msra.mxu0 0.0
  %843 = vmatprep.subr.mxu0 0.0
  %844 = vmatpush1.msra.mxu0 0.0
  %845 = vmatprep.subr.mxu0 0.0
  %846 = vmatpush1.msra.mxu0 0.0
  %847 = vmatprep.subr.mxu0 0.0
  %848 = vmatpush1.msra.mxu0 0.0
  %849 = vmatprep.subr.mxu0 0.0
  %850 = vmatpush1.msra.mxu0 0.0
  %851 = vmatprep.subr.mxu0 0.0
  %852 = vmatpush1.msra.mxu0 0.0
  %853 = vmatprep.subr.mxu0 0.0
  %854 = vmatpush1.msra.mxu0 0.0
  %855 = vmatprep.subr.mxu0 0.0
  %856 = vmatpush1.msra.mxu0 0.0
  %857 = vmatprep.subr.mxu0 0.0
  %858 = vmatpush1.msra.mxu0 0.0
  %859 = vmatprep.subr.mxu0 0.0
  %860 = vmatpush1.msra.mxu0 0.0
  %861 = vmatprep.subr.mxu0 0.0
  %862 = vmatpush1.msra.mxu0 0.0
  %863 = vmatprep.subr.mxu0 0.0
  %864 = vmatpush1.msra.mxu0 0.0
  %865 = vmatprep.subr.mxu0 0.0
  %866 = vmatpush1.msra.mxu0 0.0
  %867 = vmatprep.subr.mxu0 0.0
  %868 = vmatpush1.msra.mxu0 0.0
  %869 = vmatprep.subr.mxu0 0.0
  %870 = vmatpush1.msra.mxu0 0.0
  %871 = vmatprep.subr.mxu0 0.0
  %872 = vmatpush1.msra.mxu0 0.0
  %873 = vmatprep.subr.mxu0 0.0
  %874 = vmatpush1.msra.mxu0 0.0
  %875 = vmatprep.subr.mxu0 0.0
  %876 = vmatpush1.msra.mxu0 0.0
  %877 = vmatprep.subr.mxu0 0.0
  %878 = vmatpush1.msra.mxu0 0.0
  %879 = vmatprep.subr.mxu0 0.0
  %880 = vmatpush1.msra.mxu0 0.0
  %881 = vmatprep.subr.mxu0 0.0
  %882 = vmatpush1.msra.mxu0 0.0
  %883 = vmatprep.subr.mxu0 0.0
  %884 = vmatpush1.msra.mxu0 0.0
  %885 = vmatprep.subr.mxu0 0.0
  %886 = vmatpush1.msra.mxu0 0.0
  %887 = vmatprep.subr.mxu0 0.0
  %888 = vmatpush1.msra.mxu0 0.0
  %889 = vmatprep.subr.mxu0 0.0
  %890 = vmatpush1.msra.mxu0 0.0
  %891 = vmatprep.subr.mxu0 0.0
  %892 = vmatpush1.msra.mxu0 0.0
  %893 = vmatprep.subr.mxu0 0.0
  %894 = vmatpush1.msra.mxu0 0.0
  %895 = vmatprep.subr.mxu0 0.0
  %896 = vmatpush1.msra.mxu0 0.0
  %897 = vmatprep.mubr.f32.mxu0 0.0
  %898 = vmatmul.mubr.f32.gmra.mrb[0].mxu0 %v831
  %v899 = vpop.f32.mrb[0].mxu0
  %v900 = vadd.f32 0.0, %v899
  %v901 = vpop.f32.mrb[0].mxu0
  %902 = vdwg.mxu0
  %v904 = vrot.slane %v900, 5
  %v905 = vrot.slane %v900, 6
  %v908 = vadd.f32 %v233, %v904
  %v909 = vadd.f32 %v238, %v905
  %v910 = vtanh.pop %v908
  %v911 = vtanh.pop %v909
  %v914 = vrot.slane %v911, 7
  %vm915 = vcmask 1044484
  %v916 = vsel %vm915, %v914, %v910
  %v918 = vrot.slane %v800, 5
  %919 = vrot.lane.b32.xlu0 %v918, 8
  %v920 = vpop.permute.xlu0 %919
  %v922 = vsel %vm241, %v916, %v920
  %v924 = vrot.slane %v922, 3
  %v925 = vsel %vm336, %v924, 0
  %927 = vmatprep.subr.mxu0 0.0
  %928 = vmatpush1.msra.mxu0 %v125
  %929 = vmatprep.subr.mxu0 0.0
  %930 = vmatpush1.msra.mxu0 %v126
  %931 = vmatprep.subr.mxu0 0.0
  %932 = vmatpush1.msra.mxu0 0.0
  %933 = vmatprep.subr.mxu0 0.0
  %934 = vmatpush1.msra.mxu0 0.0
  %935 = vmatprep.subr.mxu0 0.0
  %936 = vmatpush1.msra.mxu0 0.0
  %937 = vmatprep.subr.mxu0 0.0
  %938 = vmatpush1.msra.mxu0 0.0
  %939 = vmatprep.subr.mxu0 0.0
  %940 = vmatpush1.msra.mxu0 0.0
  %941 = vmatprep.subr.mxu0 0.0
  %942 = vmatpush1.msra.mxu0 0.0
  %943 = vmatprep.subr.mxu0 0.0
  %944 = vmatpush1.msra.mxu0 0.0
  %945 = vmatprep.subr.mxu0 0.0
  %946 = vmatpush1.msra.mxu0 0.0
  %947 = vmatprep.subr.mxu0 0.0
  %948 = vmatpush1.msra.mxu0 0.0
  %949 = vmatprep.subr.mxu0 0.0
  %950 = vmatpush1.msra.mxu0 0.0
  %951 = vmatprep.subr.mxu0 0.0
  %952 = vmatpush1.msra.mxu0 0.0
  %953 = vmatprep.subr.mxu0 0.0
  %954 = vmatpush1.msra.mxu0 0.0
  %955 = vmatprep.subr.mxu0 0.0
  %956 = vmatpush1.msra.mxu0 0.0
  %957 = vmatprep.subr.mxu0 0.0
  %958 = vmatpush1.msra.mxu0 0.0
  %959 = vmatprep.subr.mxu0 0.0
  %960 = vmatpush1.msra.mxu0 0.0
  %961 = vmatprep.subr.mxu0 0.0
  %962 = vmatpush1.msra.mxu0 0.0
  %963 = vmatprep.subr.mxu0 0.0
  %964 = vmatpush1.msra.mxu0 0.0
  %965 = vmatprep.subr.mxu0 0.0
  %966 = vmatpush1.msra.mxu0 0.0
  %967 = vmatprep.subr.mxu0 0.0
  %968 = vmatpush1.msra.mxu0 0.0
  %969 = vmatprep.subr.mxu0 0.0
  %970 = vmatpush1.msra.mxu0 0.0
  %971 = vmatprep.subr.mxu0 0.0
  %972 = vmatpush1.msra.mxu0 0.0
  %973 = vmatprep.subr.mxu0 0.0
  %974 = vmatpush1.msra.mxu0 0.0
  %975 = vmatprep.subr.mxu0 0.0
  %976 = vmatpush1.msra.mxu0 0.0
  %977 = vmatprep.subr.mxu0 0.0
  %978 = vmatpush1.msra.mxu0 0.0
  %979 = vmatprep.subr.mxu0 0.0
  %980 = vmatpush1.msra.mxu0 0.0
  %981 = vmatprep.subr.mxu0 0.0
  %982 = vmatpush1.msra.mxu0 0.0
  %983 = vmatprep.subr.mxu0 0.0
  %984 = vmatpush1.msra.mxu0 0.0
  %985 = vmatprep.subr.mxu0 0.0
  %986 = vmatpush1.msra.mxu0 0.0
  %987 = vmatprep.subr.mxu0 0.0
  %988 = vmatpush1.msra.mxu0 0.0
  %989 = vmatprep.subr.mxu0 0.0
  %990 = vmatpush1.msra.mxu0 0.0
  %991 = vmatprep.mubr.f32.mxu0 0.0
  %992 = vmatmul.mubr.f32.gmra.mrb[0].mxu0 %v925
  %v993 = vpop.f32.mrb[0].mxu0
  %v994 = vadd.f32 %v334, %v993
  %v995 = vpop.f32.mrb[0].mxu0
  %996 = vdwg.mxu0
  %v997 = vtanh.pop %v994
  %v1000 = vunpack.c.l.s4 1966171168
  %v1001 = vunpack.c.0.s8 %v1000
  %v1002 = vlaneseq
  %v1003 = vshrl.u32 %v1002, 7
  %v1004 = vsub.s32 %v1001, %v1003
  %v1005 = vrot.slane %v997, %v1004
  %v1006 = vcombine.high %v1005, %v1005
  %v1008 = vunpack.c.l.s4 1966171168
  %v1009 = vunpack.c.0.s8 %v1008
  %v1010 = vlaneseq
  %v1011 = vshrl.u32 %v1010, 7
  %v1012 = vsub.s32 %v1009, %v1011
  %v1013 = vrot.slane %v1005, %v1012
  %v1015 = vunpack.c.l.s4 1966171168
  %v1016 = vunpack.c.0.s8 %v1015
  %v1017 = vlaneseq
  %v1018 = vshrl.u32 %v1017, 7
  %v1019 = vsub.s32 %v1016, %v1018
  %v1020 = vrot.slane %v1006, %v1019
  %1023 = vst.msk [vmem:[#allocation2 + $0x3] sm:$0x1] %vm436, %v1013
  %1024 = vst.msk [vmem:[#allocation2 + $0xb] sm:$0x1] %vm436, %v1020
  %v1025 = vrot.slane %v910, 3
  %v1026 = vrot.slane %v911, 2
  %v1027 = vsel %vm326, %v1026, %v1025
  %v1028 = vsel %vm241, %v1027, 0
  %1030 = vmatprep.subr.mxu0 0.0
  %1031 = vmatpush1.msra.mxu0 %v130
  %1032 = vmatprep.subr.mxu0 0.0
  %1033 = vmatpush1.msra.mxu0 0.0
  %1034 = vmatprep.subr.mxu0 0.0
  %1035 = vmatpush1.msra.mxu0 0.0
  %1036 = vmatprep.subr.mxu0 0.0
  %1037 = vmatpush1.msra.mxu0 0.0
  %1038 = vmatprep.subr.mxu0 0.0
  %1039 = vmatpush1.msra.mxu0 0.0
  %1040 = vmatprep.subr.mxu0 0.0
  %1041 = vmatpush1.msra.mxu0 0.0
  %1042 = vmatprep.subr.mxu0 0.0
  %1043 = vmatpush1.msra.mxu0 0.0
  %1044 = vmatprep.subr.mxu0 0.0
  %1045 = vmatpush1.msra.mxu0 0.0
  %1046 = vmatprep.subr.mxu0 0.0
  %1047 = vmatpush1.msra.mxu0 0.0
  %1048 = vmatprep.subr.mxu0 0.0
  %1049 = vmatpush1.msra.mxu0 0.0
  %1050 = vmatprep.subr.mxu0 0.0
  %1051 = vmatpush1.msra.mxu0 0.0
  %1052 = vmatprep.subr.mxu0 0.0
  %1053 = vmatpush1.msra.mxu0 0.0
  %1054 = vmatprep.subr.mxu0 0.0
  %1055 = vmatpush1.msra.mxu0 0.0
  %1056 = vmatprep.subr.mxu0 0.0
  %1057 = vmatpush1.msra.mxu0 0.0
  %1058 = vmatprep.subr.mxu0 0.0
  %1059 = vmatpush1.msra.mxu0 0.0
  %1060 = vmatprep.subr.mxu0 0.0
  %1061 = vmatpush1.msra.mxu0 0.0
  %1062 = vmatprep.subr.mxu0 0.0
  %1063 = vmatpush1.msra.mxu0 0.0
  %1064 = vmatprep.subr.mxu0 0.0
  %1065 = vmatpush1.msra.mxu0 0.0
  %1066 = vmatprep.subr.mxu0 0.0
  %1067 = vmatpush1.msra.mxu0 0.0
  %1068 = vmatprep.subr.mxu0 0.0
  %1069 = vmatpush1.msra.mxu0 0.0
  %1070 = vmatprep.subr.mxu0 0.0
  %1071 = vmatpush1.msra.mxu0 0.0
  %1072 = vmatprep.subr.mxu0 0.0
  %1073 = vmatpush1.msra.mxu0 0.0
  %1074 = vmatprep.subr.mxu0 0.0
  %1075 = vmatpush1.msra.mxu0 0.0
  %1076 = vmatprep.subr.mxu0 0.0
  %1077 = vmatpush1.msra.mxu0 0.0
  %1078 = vmatprep.subr.mxu0 0.0
  %1079 = vmatpush1.msra.mxu0 0.0
  %1080 = vmatprep.subr.mxu0 0.0
  %1081 = vmatpush1.msra.mxu0 0.0
  %1082 = vmatprep.subr.mxu0 0.0
  %1083 = vmatpush1.msra.mxu0 0.0
  %1084 = vmatprep.subr.mxu0 0.0
  %1085 = vmatpush1.msra.mxu0 0.0
  %1086 = vmatprep.subr.mxu0 0.0
  %1087 = vmatpush1.msra.mxu0 0.0
  %1088 = vmatprep.subr.mxu0 0.0
  %1089 = vmatpush1.msra.mxu0 0.0
  %1090 = vmatprep.subr.mxu0 0.0
  %1091 = vmatpush1.msra.mxu0 0.0
  %1092 = vmatprep.subr.mxu0 0.0
  %1093 = vmatpush1.msra.mxu0 0.0
  %1094 = vmatprep.mubr.f32.mxu0 0.0
  %1095 = vmatmul.mubr.f32.gmra.mrb[0].mxu0 %v1028
  %v1096 = vpop.f32.mrb[0].mxu0
  %v1097 = vadd.f32 0.0, %v1096
  %v1098 = vpop.f32.mrb[0].mxu0
  %1099 = vdwg.mxu0
  %v1101 = vrot.slane %v1097, 4
  %v1102 = vrot.slane %v1097, 5
  %v1105 = vadd.f32 %v233, %v1101
  %v1106 = vadd.f32 %v238, %v1102
  %v1107 = vtanh.pop %v1105
  %v1108 = vtanh.pop %v1106
  %v1111 = vrot.slane %v1108, 7
  %vm1112 = vcmask 1045509
  %v1113 = vsel %vm1112, %v1111, %v1107
  %v1115 = vrot.slane %v997, 4
  %1116 = vrot.lane.b32.xlu0 %v1115, 8
  %v1117 = vpop.permute.xlu0 %1116
  %v1119 = vsel %vm241, %v1113, %v1117
  %v1121 = vrot.slane %v1119, 4
  %v1122 = vsel %vm336, %v1121, 0
  %1124 = vmatprep.subr.mxu0 0.0
  %1125 = vmatpush1.msra.mxu0 %v125
  %1126 = vmatprep.subr.mxu0 0.0
  %1127 = vmatpush1.msra.mxu0 %v126
  %1128 = vmatprep.subr.mxu0 0.0
  %1129 = vmatpush1.msra.mxu0 0.0
  %1130 = vmatprep.subr.mxu0 0.0
  %1131 = vmatpush1.msra.mxu0 0.0
  %1132 = vmatprep.subr.mxu0 0.0
  %1133 = vmatpush1.msra.mxu0 0.0
  %1134 = vmatprep.subr.mxu0 0.0
  %1135 = vmatpush1.msra.mxu0 0.0
  %1136 = vmatprep.subr.mxu0 0.0
  %1137 = vmatpush1.msra.mxu0 0.0
  %1138 = vmatprep.subr.mxu0 0.0
  %1139 = vmatpush1.msra.mxu0 0.0
  %1140 = vmatprep.subr.mxu0 0.0
  %1141 = vmatpush1.msra.mxu0 0.0
  %1142 = vmatprep.subr.mxu0 0.0
  %1143 = vmatpush1.msra.mxu0 0.0
  %1144 = vmatprep.subr.mxu0 0.0
  %1145 = vmatpush1.msra.mxu0 0.0
  %1146 = vmatprep.subr.mxu0 0.0
  %1147 = vmatpush1.msra.mxu0 0.0
  %1148 = vmatprep.subr.mxu0 0.0
  %1149 = vmatpush1.msra.mxu0 0.0
  %1150 = vmatprep.subr.mxu0 0.0
  %1151 = vmatpush1.msra.mxu0 0.0
  %1152 = vmatprep.subr.mxu0 0.0
  %1153 = vmatpush1.msra.mxu0 0.0
  %1154 = vmatprep.subr.mxu0 0.0
  %1155 = vmatpush1.msra.mxu0 0.0
  %1156 = vmatprep.subr.mxu0 0.0
  %1157 = vmatpush1.msra.mxu0 0.0
  %1158 = vmatprep.subr.mxu0 0.0
  %1159 = vmatpush1.msra.mxu0 0.0
  %1160 = vmatprep.subr.mxu0 0.0
  %1161 = vmatpush1.msra.mxu0 0.0
  %1162 = vmatprep.subr.mxu0 0.0
  %1163 = vmatpush1.msra.mxu0 0.0
  %1164 = vmatprep.subr.mxu0 0.0
  %1165 = vmatpush1.msra.mxu0 0.0
  %1166 = vmatprep.subr.mxu0 0.0
  %1167 = vmatpush1.msra.mxu0 0.0
  %1168 = vmatprep.subr.mxu0 0.0
  %1169 = vmatpush1.msra.mxu0 0.0
  %1170 = vmatprep.subr.mxu0 0.0
  %1171 = vmatpush1.msra.mxu0 0.0
  %1172 = vmatprep.subr.mxu0 0.0
  %1173 = vmatpush1.msra.mxu0 0.0
  %1174 = vmatprep.subr.mxu0 0.0
  %1175 = vmatpush1.msra.mxu0 0.0
  %1176 = vmatprep.subr.mxu0 0.0
  %1177 = vmatpush1.msra.mxu0 0.0
  %1178 = vmatprep.subr.mxu0 0.0
  %1179 = vmatpush1.msra.mxu0 0.0
  %1180 = vmatprep.subr.mxu0 0.0
  %1181 = vmatpush1.msra.mxu0 0.0
  %1182 = vmatprep.subr.mxu0 0.0
  %1183 = vmatpush1.msra.mxu0 0.0
  %1184 = vmatprep.subr.mxu0 0.0
  %1185 = vmatpush1.msra.mxu0 0.0
  %1186 = vmatprep.subr.mxu0 0.0
  %1187 = vmatpush1.msra.mxu0 0.0
  %1188 = vmatprep.mubr.f32.mxu0 0.0
  %1189 = vmatmul.mubr.f32.gmra.mrb[0].mxu0 %v1122
  %v1190 = vpop.f32.mrb[0].mxu0
  %v1191 = vadd.f32 %v334, %v1190
  %v1192 = vpop.f32.mrb[0].mxu0
  %1193 = vdwg.mxu0
  %v1194 = vtanh.pop %v1191
  %v1197 = vunpack.c.l.s4 1966171168
  %v1198 = vunpack.c.0.s8 %v1197
  %v1199 = vlaneseq
  %v1200 = vshrl.u32 %v1199, 7
  %v1201 = vsub.s32 %v1198, %v1200
  %v1202 = vrot.slane %v1194, %v1201
  %v1203 = vcombine.high %v1202, %v1202
  %v1205 = vunpack.c.l.s4 1966171168
  %v1206 = vunpack.c.0.s8 %v1205
  %v1207 = vlaneseq
  %v1208 = vshrl.u32 %v1207, 7
  %v1209 = vsub.s32 %v1206, %v1208
  %v1210 = vrot.slane %v1202, %v1209
  %v1212 = vunpack.c.l.s4 1966171168
  %v1213 = vunpack.c.0.s8 %v1212
  %v1214 = vlaneseq
  %v1215 = vshrl.u32 %v1214, 7
  %v1216 = vsub.s32 %v1213, %v1215
  %v1217 = vrot.slane %v1203, %v1216
  %1220 = vst.msk [vmem:[#allocation2 + $0x4] sm:$0x1] %vm436, %v1210
  %1221 = vst.msk [vmem:[#allocation2 + $0xc] sm:$0x1] %vm436, %v1217
  %v1222 = vrot.slane %v1107, 4
  %v1223 = vrot.slane %v1108, 3
  %v1224 = vsel %vm326, %v1223, %v1222
  %v1225 = vsel %vm241, %v1224, 0
  %1227 = vmatprep.subr.mxu0 0.0
  %1228 = vmatpush1.msra.mxu0 %v130
  %1229 = vmatprep.subr.mxu0 0.0
  %1230 = vmatpush1.msra.mxu0 0.0
  %1231 = vmatprep.subr.mxu0 0.0
  %1232 = vmatpush1.msra.mxu0 0.0
  %1233 = vmatprep.subr.mxu0 0.0
  %1234 = vmatpush1.msra.mxu0 0.0
  %1235 = vmatprep.subr.mxu0 0.0
  %1236 = vmatpush1.msra.mxu0 0.0
  %1237 = vmatprep.subr.mxu0 0.0
  %1238 = vmatpush1.msra.mxu0 0.0
  %1239 = vmatprep.subr.mxu0 0.0
  %1240 = vmatpush1.msra.mxu0 0.0
  %1241 = vmatprep.subr.mxu0 0.0
  %1242 = vmatpush1.msra.mxu0 0.0
  %1243 = vmatprep.subr.mxu0 0.0
  %1244 = vmatpush1.msra.mxu0 0.0
  %1245 = vmatprep.subr.mxu0 0.0
  %1246 = vmatpush1.msra.mxu0 0.0
  %1247 = vmatprep.subr.mxu0 0.0
  %1248 = vmatpush1.msra.mxu0 0.0
  %1249 = vmatprep.subr.mxu0 0.0
  %1250 = vmatpush1.msra.mxu0 0.0
  %1251 = vmatprep.subr.mxu0 0.0
  %1252 = vmatpush1.msra.mxu0 0.0
  %1253 = vmatprep.subr.mxu0 0.0
  %1254 = vmatpush1.msra.mxu0 0.0
  %1255 = vmatprep.subr.mxu0 0.0
  %1256 = vmatpush1.msra.mxu0 0.0
  %1257 = vmatprep.subr.mxu0 0.0
  %1258 = vmatpush1.msra.mxu0 0.0
  %1259 = vmatprep.subr.mxu0 0.0
  %1260 = vmatpush1.msra.mxu0 0.0
  %1261 = vmatprep.subr.mxu0 0.0
  %1262 = vmatpush1.msra.mxu0 0.0
  %1263 = vmatprep.subr.mxu0 0.0
  %1264 = vmatpush1.msra.mxu0 0.0
  %1265 = vmatprep.subr.mxu0 0.0
  %1266 = vmatpush1.msra.mxu0 0.0
  %1267 = vmatprep.subr.mxu0 0.0
  %1268 = vmatpush1.msra.mxu0 0.0
  %1269 = vmatprep.subr.mxu0 0.0
  %1270 = vmatpush1.msra.mxu0 0.0
  %1271 = vmatprep.subr.mxu0 0.0
  %1272 = vmatpush1.msra.mxu0 0.0
  %1273 = vmatprep.subr.mxu0 0.0
  %1274 = vmatpush1.msra.mxu0 0.0
  %1275 = vmatprep.subr.mxu0 0.0
  %1276 = vmatpush1.msra.mxu0 0.0
  %1277 = vmatprep.subr.mxu0 0.0
  %1278 = vmatpush1.msra.mxu0 0.0
  %1279 = vmatprep.subr.mxu0 0.0
  %1280 = vmatpush1.msra.mxu0 0.0
  %1281 = vmatprep.subr.mxu0 0.0
  %1282 = vmatpush1.msra.mxu0 0.0
  %1283 = vmatprep.subr.mxu0 0.0
  %1284 = vmatpush1.msra.mxu0 0.0
  %1285 = vmatprep.subr.mxu0 0.0
  %1286 = vmatpush1.msra.mxu0 0.0
  %1287 = vmatprep.subr.mxu0 0.0
  %1288 = vmatpush1.msra.mxu0 0.0
  %1289 = vmatprep.subr.mxu0 0.0
  %1290 = vmatpush1.msra.mxu0 0.0
  %1291 = vmatprep.mubr.f32.mxu0 0.0
  %1292 = vmatmul.mubr.f32.gmra.mrb[0].mxu0 %v1225
  %v1293 = vpop.f32.mrb[0].mxu0
  %v1294 = vadd.f32 0.0, %v1293
  %v1295 = vpop.f32.mrb[0].mxu0
  %1296 = vdwg.mxu0
  %v1298 = vrot.slane %v1294, 3
  %v1299 = vrot.slane %v1294, 4
  %v1302 = vadd.f32 %v233, %v1298
  %v1303 = vadd.f32 %v238, %v1299
  %v1304 = vtanh.pop %v1302
  %v1305 = vtanh.pop %v1303
  %v1308 = vrot.slane %v1305, 7
  %vm1309 = vcmask 1046534
  %v1310 = vsel %vm1309, %v1308, %v1304
  %v1312 = vrot.slane %v1194, 3
  %1313 = vrot.lane.b32.xlu0 %v1312, 8
  %v1314 = vpop.permute.xlu0 %1313
  %v1316 = vsel %vm241, %v1310, %v1314
  %v1318 = vrot.slane %v1316, 5
  %v1319 = vsel %vm336, %v1318, 0
  %1321 = vmatprep.subr.mxu0 0.0
  %1322 = vmatpush1.msra.mxu0 %v125
  %1323 = vmatprep.subr.mxu0 0.0
  %1324 = vmatpush1.msra.mxu0 %v126
  %1325 = vmatprep.subr.mxu0 0.0
  %1326 = vmatpush1.msra.mxu0 0.0
  %1327 = vmatprep.subr.mxu0 0.0
  %1328 = vmatpush1.msra.mxu0 0.0
  %1329 = vmatprep.subr.mxu0 0.0
  %1330 = vmatpush1.msra.mxu0 0.0
  %1331 = vmatprep.subr.mxu0 0.0
  %1332 = vmatpush1.msra.mxu0 0.0
  %1333 = vmatprep.subr.mxu0 0.0
  %1334 = vmatpush1.msra.mxu0 0.0
  %1335 = vmatprep.subr.mxu0 0.0
  %1336 = vmatpush1.msra.mxu0 0.0
  %1337 = vmatprep.subr.mxu0 0.0
  %1338 = vmatpush1.msra.mxu0 0.0
  %1339 = vmatprep.subr.mxu0 0.0
  %1340 = vmatpush1.msra.mxu0 0.0
  %1341 = vmatprep.subr.mxu0 0.0
  %1342 = vmatpush1.msra.mxu0 0.0
  %1343 = vmatprep.subr.mxu0 0.0
  %1344 = vmatpush1.msra.mxu0 0.0
  %1345 = vmatprep.subr.mxu0 0.0
  %1346 = vmatpush1.msra.mxu0 0.0
  %1347 = vmatprep.subr.mxu0 0.0
  %1348 = vmatpush1.msra.mxu0 0.0
  %1349 = vmatprep.subr.mxu0 0.0
  %1350 = vmatpush1.msra.mxu0 0.0
  %1351 = vmatprep.subr.mxu0 0.0
  %1352 = vmatpush1.msra.mxu0 0.0
  %1353 = vmatprep.subr.mxu0 0.0
  %1354 = vmatpush1.msra.mxu0 0.0
  %1355 = vmatprep.subr.mxu0 0.0
  %1356 = vmatpush1.msra.mxu0 0.0
  %1357 = vmatprep.subr.mxu0 0.0
  %1358 = vmatpush1.msra.mxu0 0.0
  %1359 = vmatprep.subr.mxu0 0.0
  %1360 = vmatpush1.msra.mxu0 0.0
  %1361 = vmatprep.subr.mxu0 0.0
  %1362 = vmatpush1.msra.mxu0 0.0
  %1363 = vmatprep.subr.mxu0 0.0
  %1364 = vmatpush1.msra.mxu0 0.0
  %1365 = vmatprep.subr.mxu0 0.0
  %1366 = vmatpush1.msra.mxu0 0.0
  %1367 = vmatprep.subr.mxu0 0.0
  %1368 = vmatpush1.msra.mxu0 0.0
  %1369 = vmatprep.subr.mxu0 0.0
  %1370 = vmatpush1.msra.mxu0 0.0
  %1371 = vmatprep.subr.mxu0 0.0
  %1372 = vmatpush1.msra.mxu0 0.0
  %1373 = vmatprep.subr.mxu0 0.0
  %1374 = vmatpush1.msra.mxu0 0.0
  %1375 = vmatprep.subr.mxu0 0.0
  %1376 = vmatpush1.msra.mxu0 0.0
  %1377 = vmatprep.subr.mxu0 0.0
  %1378 = vmatpush1.msra.mxu0 0.0
  %1379 = vmatprep.subr.mxu0 0.0
  %1380 = vmatpush1.msra.mxu0 0.0
  %1381 = vmatprep.subr.mxu0 0.0
  %1382 = vmatpush1.msra.mxu0 0.0
  %1383 = vmatprep.subr.mxu0 0.0
  %1384 = vmatpush1.msra.mxu0 0.0
  %1385 = vmatprep.mubr.f32.mxu0 0.0
  %1386 = vmatmul.mubr.f32.gmra.mrb[0].mxu0 %v1319
  %v1387 = vpop.f32.mrb[0].mxu0
  %v1388 = vadd.f32 %v334, %v1387
  %v1389 = vpop.f32.mrb[0].mxu0
  %1390 = vdwg.mxu0
  %v1391 = vtanh.pop %v1388
  %v1394 = vunpack.c.l.s4 1966171168
  %v1395 = vunpack.c.0.s8 %v1394
  %v1396 = vlaneseq
  %v1397 = vshrl.u32 %v1396, 7
  %v1398 = vsub.s32 %v1395, %v1397
  %v1399 = vrot.slane %v1391, %v1398
  %v1400 = vcombine.high %v1399, %v1399
  %v1402 = vunpack.c.l.s4 1966171168
  %v1403 = vunpack.c.0.s8 %v1402
  %v1404 = vlaneseq
  %v1405 = vshrl.u32 %v1404, 7
  %v1406 = vsub.s32 %v1403, %v1405
  %v1407 = vrot.slane %v1399, %v1406
  %v1409 = vunpack.c.l.s4 1966171168
  %v1410 = vunpack.c.0.s8 %v1409
  %v1411 = vlaneseq
  %v1412 = vshrl.u32 %v1411, 7
  %v1413 = vsub.s32 %v1410, %v1412
  %v1414 = vrot.slane %v1400, %v1413
  %1417 = vst.msk [vmem:[#allocation2 + $0x5] sm:$0x1] %vm436, %v1407
  %1418 = vst.msk [vmem:[#allocation2 + $0xd] sm:$0x1] %vm436, %v1414
  %v1419 = vrot.slane %v1304, 5
  %v1420 = vrot.slane %v1305, 4
  %v1421 = vsel %vm326, %v1420, %v1419
  %v1422 = vsel %vm241, %v1421, 0
  %1424 = vmatprep.subr.mxu0 0.0
  %1425 = vmatpush1.msra.mxu0 %v130
  %1426 = vmatprep.subr.mxu0 0.0
  %1427 = vmatpush1.msra.mxu0 0.0
  %1428 = vmatprep.subr.mxu0 0.0
  %1429 = vmatpush1.msra.mxu0 0.0
  %1430 = vmatprep.subr.mxu0 0.0
  %1431 = vmatpush1.msra.mxu0 0.0
  %1432 = vmatprep.subr.mxu0 0.0
  %1433 = vmatpush1.msra.mxu0 0.0
  %1434 = vmatprep.subr.mxu0 0.0
  %1435 = vmatpush1.msra.mxu0 0.0
  %1436 = vmatprep.subr.mxu0 0.0
  %1437 = vmatpush1.msra.mxu0 0.0
  %1438 = vmatprep.subr.mxu0 0.0
  %1439 = vmatpush1.msra.mxu0 0.0
  %1440 = vmatprep.subr.mxu0 0.0
  %1441 = vmatpush1.msra.mxu0 0.0
  %1442 = vmatprep.subr.mxu0 0.0
  %1443 = vmatpush1.msra.mxu0 0.0
  %1444 = vmatprep.subr.mxu0 0.0
  %1445 = vmatpush1.msra.mxu0 0.0
  %1446 = vmatprep.subr.mxu0 0.0
  %1447 = vmatpush1.msra.mxu0 0.0
  %1448 = vmatprep.subr.mxu0 0.0
  %1449 = vmatpush1.msra.mxu0 0.0
  %1450 = vmatprep.subr.mxu0 0.0
  %1451 = vmatpush1.msra.mxu0 0.0
  %1452 = vmatprep.subr.mxu0 0.0
  %1453 = vmatpush1.msra.mxu0 0.0
  %1454 = vmatprep.subr.mxu0 0.0
  %1455 = vmatpush1.msra.mxu0 0.0
  %1456 = vmatprep.subr.mxu0 0.0
  %1457 = vmatpush1.msra.mxu0 0.0
  %1458 = vmatprep.subr.mxu0 0.0
  %1459 = vmatpush1.msra.mxu0 0.0
  %1460 = vmatprep.subr.mxu0 0.0
  %1461 = vmatpush1.msra.mxu0 0.0
  %1462 = vmatprep.subr.mxu0 0.0
  %1463 = vmatpush1.msra.mxu0 0.0
  %1464 = vmatprep.subr.mxu0 0.0
  %1465 = vmatpush1.msra.mxu0 0.0
  %1466 = vmatprep.subr.mxu0 0.0
  %1467 = vmatpush1.msra.mxu0 0.0
  %1468 = vmatprep.subr.mxu0 0.0
  %1469 = vmatpush1.msra.mxu0 0.0
  %1470 = vmatprep.subr.mxu0 0.0
  %1471 = vmatpush1.msra.mxu0 0.0
  %1472 = vmatprep.subr.mxu0 0.0
  %1473 = vmatpush1.msra.mxu0 0.0
  %1474 = vmatprep.subr.mxu0 0.0
  %1475 = vmatpush1.msra.mxu0 0.0
  %1476 = vmatprep.subr.mxu0 0.0
  %1477 = vmatpush1.msra.mxu0 0.0
  %1478 = vmatprep.subr.mxu0 0.0
  %1479 = vmatpush1.msra.mxu0 0.0
  %1480 = vmatprep.subr.mxu0 0.0
  %1481 = vmatpush1.msra.mxu0 0.0
  %1482 = vmatprep.subr.mxu0 0.0
  %1483 = vmatpush1.msra.mxu0 0.0
  %1484 = vmatprep.subr.mxu0 0.0
  %1485 = vmatpush1.msra.mxu0 0.0
  %1486 = vmatprep.subr.mxu0 0.0
  %1487 = vmatpush1.msra.mxu0 0.0
  %1488 = vmatprep.mubr.f32.mxu0 0.0
  %1489 = vmatmul.mubr.f32.gmra.mrb[0].mxu0 %v1422
  %v1490 = vpop.f32.mrb[0].mxu0
  %v1491 = vadd.f32 0.0, %v1490
  %v1492 = vpop.f32.mrb[0].mxu0
  %1493 = vdwg.mxu0
  %v1495 = vrot.slane %v1491, 2
  %v1496 = vrot.slane %v1491, 3
  %v1499 = vadd.f32 %v233, %v1495
  %v1500 = vadd.f32 %v238, %v1496
  %v1501 = vtanh.pop %v1499
  %v1502 = vtanh.pop %v1500
  %v1505 = vrot.slane %v1502, 7
  %vm1506 = vcmask 1047559
  %v1507 = vsel %vm1506, %v1505, %v1501
  %v1509 = vrot.slane %v1391, 2
  %1510 = vrot.lane.b32.xlu0 %v1509, 8
  %v1511 = vpop.permute.xlu0 %1510
  %v1513 = vsel %vm241, %v1507, %v1511
  %v1515 = vrot.slane %v1513, 6
  %v1516 = vsel %vm336, %v1515, 0
  %1518 = vmatprep.subr.mxu0 0.0
  %1519 = vmatpush1.msra.mxu0 %v125
  %1520 = vmatprep.subr.mxu0 0.0
  %1521 = vmatpush1.msra.mxu0 %v126
  %1522 = vmatprep.subr.mxu0 0.0
  %1523 = vmatpush1.msra.mxu0 0.0
  %1524 = vmatprep.subr.mxu0 0.0
  %1525 = vmatpush1.msra.mxu0 0.0
  %1526 = vmatprep.subr.mxu0 0.0
  %1527 = vmatpush1.msra.mxu0 0.0
  %1528 = vmatprep.subr.mxu0 0.0
  %1529 = vmatpush1.msra.mxu0 0.0
  %1530 = vmatprep.subr.mxu0 0.0
  %1531 = vmatpush1.msra.mxu0 0.0
  %1532 = vmatprep.subr.mxu0 0.0
  %1533 = vmatpush1.msra.mxu0 0.0
  %1534 = vmatprep.subr.mxu0 0.0
  %1535 = vmatpush1.msra.mxu0 0.0
  %1536 = vmatprep.subr.mxu0 0.0
  %1537 = vmatpush1.msra.mxu0 0.0
  %1538 = vmatprep.subr.mxu0 0.0
  %1539 = vmatpush1.msra.mxu0 0.0
  %1540 = vmatprep.subr.mxu0 0.0
  %1541 = vmatpush1.msra.mxu0 0.0
  %1542 = vmatprep.subr.mxu0 0.0
  %1543 = vmatpush1.msra.mxu0 0.0
  %1544 = vmatprep.subr.mxu0 0.0
  %1545 = vmatpush1.msra.mxu0 0.0
  %1546 = vmatprep.subr.mxu0 0.0
  %1547 = vmatpush1.msra.mxu0 0.0
  %1548 = vmatprep.subr.mxu0 0.0
  %1549 = vmatpush1.msra.mxu0 0.0
  %1550 = vmatprep.subr.mxu0 0.0
  %1551 = vmatpush1.msra.mxu0 0.0
  %1552 = vmatprep.subr.mxu0 0.0
  %1553 = vmatpush1.msra.mxu0 0.0
  %1554 = vmatprep.subr.mxu0 0.0
  %1555 = vmatpush1.msra.mxu0 0.0
  %1556 = vmatprep.subr.mxu0 0.0
  %1557 = vmatpush1.msra.mxu0 0.0
  %1558 = vmatprep.subr.mxu0 0.0
  %1559 = vmatpush1.msra.mxu0 0.0
  %1560 = vmatprep.subr.mxu0 0.0
  %1561 = vmatpush1.msra.mxu0 0.0
  %1562 = vmatprep.subr.mxu0 0.0
  %1563 = vmatpush1.msra.mxu0 0.0
  %1564 = vmatprep.subr.mxu0 0.0
  %1565 = vmatpush1.msra.mxu0 0.0
  %1566 = vmatprep.subr.mxu0 0.0
  %1567 = vmatpush1.msra.mxu0 0.0
  %1568 = vmatprep.subr.mxu0 0.0
  %1569 = vmatpush1.msra.mxu0 0.0
  %1570 = vmatprep.subr.mxu0 0.0
  %1571 = vmatpush1.msra.mxu0 0.0
  %1572 = vmatprep.subr.mxu0 0.0
  %1573 = vmatpush1.msra.mxu0 0.0
  %1574 = vmatprep.subr.mxu0 0.0
  %1575 = vmatpush1.msra.mxu0 0.0
  %1576 = vmatprep.subr.mxu0 0.0
  %1577 = vmatpush1.msra.mxu0 0.0
  %1578 = vmatprep.subr.mxu0 0.0
  %1579 = vmatpush1.msra.mxu0 0.0
  %1580 = vmatprep.subr.mxu0 0.0
  %1581 = vmatpush1.msra.mxu0 0.0
  %1582 = vmatprep.mubr.f32.mxu0 0.0
  %1583 = vmatmul.mubr.f32.gmra.mrb[0].mxu0 %v1516
  %v1584 = vpop.f32.mrb[0].mxu0
  %v1585 = vadd.f32 %v334, %v1584
  %v1586 = vpop.f32.mrb[0].mxu0
  %1587 = vdwg.mxu0
  %v1588 = vtanh.pop %v1585
  %v1591 = vunpack.c.l.s4 1966171168
  %v1592 = vunpack.c.0.s8 %v1591
  %v1593 = vlaneseq
  %v1594 = vshrl.u32 %v1593, 7
  %v1595 = vsub.s32 %v1592, %v1594
  %v1596 = vrot.slane %v1588, %v1595
  %v1597 = vcombine.high %v1596, %v1596
  %v1599 = vunpack.c.l.s4 1966171168
  %v1600 = vunpack.c.0.s8 %v1599
  %v1601 = vlaneseq
  %v1602 = vshrl.u32 %v1601, 7
  %v1603 = vsub.s32 %v1600, %v1602
  %v1604 = vrot.slane %v1596, %v1603
  %v1606 = vunpack.c.l.s4 1966171168
  %v1607 = vunpack.c.0.s8 %v1606
  %v1608 = vlaneseq
  %v1609 = vshrl.u32 %v1608, 7
  %v1610 = vsub.s32 %v1607, %v1609
  %v1611 = vrot.slane %v1597, %v1610
  %1614 = vst.msk [vmem:[#allocation2 + $0x6] sm:$0x1] %vm436, %v1604
  %1615 = vst.msk [vmem:[#allocation2 + $0xe] sm:$0x1] %vm436, %v1611
  %v1616 = vrot.slane %v1501, 6
  %v1617 = vrot.slane %v1502, 5
  %v1618 = vsel %vm326, %v1617, %v1616
  %v1619 = vsel %vm241, %v1618, 0
  %1621 = vmatprep.subr.mxu0 0.0
  %1622 = vmatpush1.msra.mxu0 %v130
  %1623 = vmatprep.subr.mxu0 0.0
  %1624 = vmatpush1.msra.mxu0 0.0
  %1625 = vmatprep.subr.mxu0 0.0
  %1626 = vmatpush1.msra.mxu0 0.0
  %1627 = vmatprep.subr.mxu0 0.0
  %1628 = vmatpush1.msra.mxu0 0.0
  %1629 = vmatprep.subr.mxu0 0.0
  %1630 = vmatpush1.msra.mxu0 0.0
  %1631 = vmatprep.subr.mxu0 0.0
  %1632 = vmatpush1.msra.mxu0 0.0
  %1633 = vmatprep.subr.mxu0 0.0
  %1634 = vmatpush1.msra.mxu0 0.0
  %1635 = vmatprep.subr.mxu0 0.0
  %1636 = vmatpush1.msra.mxu0 0.0
  %1637 = vmatprep.subr.mxu0 0.0
  %1638 = vmatpush1.msra.mxu0 0.0
  %1639 = vmatprep.subr.mxu0 0.0
  %1640 = vmatpush1.msra.mxu0 0.0
  %1641 = vmatprep.subr.mxu0 0.0
  %1642 = vmatpush1.msra.mxu0 0.0
  %1643 = vmatprep.subr.mxu0 0.0
  %1644 = vmatpush1.msra.mxu0 0.0
  %1645 = vmatprep.subr.mxu0 0.0
  %1646 = vmatpush1.msra.mxu0 0.0
  %1647 = vmatprep.subr.mxu0 0.0
  %1648 = vmatpush1.msra.mxu0 0.0
  %1649 = vmatprep.subr.mxu0 0.0
  %1650 = vmatpush1.msra.mxu0 0.0
  %1651 = vmatprep.subr.mxu0 0.0
  %1652 = vmatpush1.msra.mxu0 0.0
  %1653 = vmatprep.subr.mxu0 0.0
  %1654 = vmatpush1.msra.mxu0 0.0
  %1655 = vmatprep.subr.mxu0 0.0
  %1656 = vmatpush1.msra.mxu0 0.0
  %1657 = vmatprep.subr.mxu0 0.0
  %1658 = vmatpush1.msra.mxu0 0.0
  %1659 = vmatprep.subr.mxu0 0.0
  %1660 = vmatpush1.msra.mxu0 0.0
  %1661 = vmatprep.subr.mxu0 0.0
  %1662 = vmatpush1.msra.mxu0 0.0
  %1663 = vmatprep.subr.mxu0 0.0
  %1664 = vmatpush1.msra.mxu0 0.0
  %1665 = vmatprep.subr.mxu0 0.0
  %1666 = vmatpush1.msra.mxu0 0.0
  %1667 = vmatprep.subr.mxu0 0.0
  %1668 = vmatpush1.msra.mxu0 0.0
  %1669 = vmatprep.subr.mxu0 0.0
  %1670 = vmatpush1.msra.mxu0 0.0
  %1671 = vmatprep.subr.mxu0 0.0
  %1672 = vmatpush1.msra.mxu0 0.0
  %1673 = vmatprep.subr.mxu0 0.0
  %1674 = vmatpush1.msra.mxu0 0.0
  %1675 = vmatprep.subr.mxu0 0.0
  %1676 = vmatpush1.msra.mxu0 0.0
  %1677 = vmatprep.subr.mxu0 0.0
  %1678 = vmatpush1.msra.mxu0 0.0
  %1679 = vmatprep.subr.mxu0 0.0
  %1680 = vmatpush1.msra.mxu0 0.0
  %1681 = vmatprep.subr.mxu0 0.0
  %1682 = vmatpush1.msra.mxu0 0.0
  %1683 = vmatprep.subr.mxu0 0.0
  %1684 = vmatpush1.msra.mxu0 0.0
  %1685 = vmatprep.mubr.f32.mxu0 0.0
  %1686 = vmatmul.mubr.f32.gmra.mrb[0].mxu0 %v1619
  %v1687 = vpop.f32.mrb[0].mxu0
  %v1688 = vadd.f32 0.0, %v1687
  %v1689 = vpop.f32.mrb[0].mxu0
  %1690 = vdwg.mxu0
  %v1692 = vrot.slane %v1688, 1
  %v1693 = vrot.slane %v1688, 2
  %v1696 = vadd.f32 %v233, %v1692
  %v1697 = vadd.f32 %v238, %v1693
  %v1698 = vtanh.pop %v1696
  %v1699 = vtanh.pop %v1697
  %v1702 = vrot.slane %v1699, 7
  %v1705 = vrot.slane %v1588, 1
  %1706 = vrot.lane.b32.xlu0 %v1705, 8
  %v1707 = vpop.permute.xlu0 %1706
  %v1709 = vsel %vm241, %v1698, %v1707
  %v1710 = vsel %vm241, %v1702, %v1707
  %vm1713 = vcmask 1040384
  %v1714 = vrot.slane %v1709, 7
  %v1715 = vrot.slane %v1710, 7
  %v1716 = vsel %vm1713, %v1714, %v1715
  %v1717 = vsel %vm336, %v1716, 0
  %1719 = vmatprep.subr.mxu0 0.0
  %1720 = vmatpush1.msra.mxu0 %v125
  %1721 = vmatprep.subr.mxu0 0.0
  %1722 = vmatpush1.msra.mxu0 %v126
  %1723 = vmatprep.subr.mxu0 0.0
  %1724 = vmatpush1.msra.mxu0 0.0
  %1725 = vmatprep.subr.mxu0 0.0
  %1726 = vmatpush1.msra.mxu0 0.0
  %1727 = vmatprep.subr.mxu0 0.0
  %1728 = vmatpush1.msra.mxu0 0.0
  %1729 = vmatprep.subr.mxu0 0.0
  %1730 = vmatpush1.msra.mxu0 0.0
  %1731 = vmatprep.subr.mxu0 0.0
  %1732 = vmatpush1.msra.mxu0 0.0
  %1733 = vmatprep.subr.mxu0 0.0
  %1734 = vmatpush1.msra.mxu0 0.0
  %1735 = vmatprep.subr.mxu0 0.0
  %1736 = vmatpush1.msra.mxu0 0.0
  %1737 = vmatprep.subr.mxu0 0.0
  %1738 = vmatpush1.msra.mxu0 0.0
  %1739 = vmatprep.subr.mxu0 0.0
  %1740 = vmatpush1.msra.mxu0 0.0
  %1741 = vmatprep.subr.mxu0 0.0
  %1742 = vmatpush1.msra.mxu0 0.0
  %1743 = vmatprep.subr.mxu0 0.0
  %1744 = vmatpush1.msra.mxu0 0.0
  %1745 = vmatprep.subr.mxu0 0.0
  %1746 = vmatpush1.msra.mxu0 0.0
  %1747 = vmatprep.subr.mxu0 0.0
  %1748 = vmatpush1.msra.mxu0 0.0
  %1749 = vmatprep.subr.mxu0 0.0
  %1750 = vmatpush1.msra.mxu0 0.0
  %1751 = vmatprep.subr.mxu0 0.0
  %1752 = vmatpush1.msra.mxu0 0.0
  %1753 = vmatprep.subr.mxu0 0.0
  %1754 = vmatpush1.msra.mxu0 0.0
  %1755 = vmatprep.subr.mxu0 0.0
  %1756 = vmatpush1.msra.mxu0 0.0
  %1757 = vmatprep.subr.mxu0 0.0
  %1758 = vmatpush1.msra.mxu0 0.0
  %1759 = vmatprep.subr.mxu0 0.0
  %1760 = vmatpush1.msra.mxu0 0.0
  %1761 = vmatprep.subr.mxu0 0.0
  %1762 = vmatpush1.msra.mxu0 0.0
  %1763 = vmatprep.subr.mxu0 0.0
  %1764 = vmatpush1.msra.mxu0 0.0
  %1765 = vmatprep.subr.mxu0 0.0
  %1766 = vmatpush1.msra.mxu0 0.0
  %1767 = vmatprep.subr.mxu0 0.0
  %1768 = vmatpush1.msra.mxu0 0.0
  %1769 = vmatprep.subr.mxu0 0.0
  %1770 = vmatpush1.msra.mxu0 0.0
  %1771 = vmatprep.subr.mxu0 0.0
  %1772 = vmatpush1.msra.mxu0 0.0
  %1773 = vmatprep.subr.mxu0 0.0
  %1774 = vmatpush1.msra.mxu0 0.0
  %1775 = vmatprep.subr.mxu0 0.0
  %1776 = vmatpush1.msra.mxu0 0.0
  %1777 = vmatprep.subr.mxu0 0.0
  %1778 = vmatpush1.msra.mxu0 0.0
  %1779 = vmatprep.subr.mxu0 0.0
  %1780 = vmatpush1.msra.mxu0 0.0
  %1781 = vmatprep.subr.mxu0 0.0
  %1782 = vmatpush1.msra.mxu0 0.0
  %1783 = vmatprep.mubr.f32.mxu0 0.0
  %1784 = vmatmul.mubr.f32.gmra.mrb[0].mxu0 %v1717
  %v1785 = vpop.f32.mrb[0].mxu0
  %v1786 = vadd.f32 %v334, %v1785
  %v1787 = vpop.f32.mrb[0].mxu0
  %1788 = vdwg.mxu0
  %v1789 = vtanh.pop %v1786
  %v1792 = vunpack.c.l.s4 1966171168
  %v1793 = vunpack.c.0.s8 %v1792
  %v1794 = vlaneseq
  %v1795 = vshrl.u32 %v1794, 7
  %v1796 = vsub.s32 %v1793, %v1795
  %v1797 = vrot.slane %v1789, %v1796
  %v1798 = vcombine.high %v1797, %v1797
  %v1800 = vunpack.c.l.s4 1966171168
  %v1801 = vunpack.c.0.s8 %v1800
  %v1802 = vlaneseq
  %v1803 = vshrl.u32 %v1802, 7
  %v1804 = vsub.s32 %v1801, %v1803
  %v1805 = vrot.slane %v1797, %v1804
  %v1807 = vunpack.c.l.s4 1966171168
  %v1808 = vunpack.c.0.s8 %v1807
  %v1809 = vlaneseq
  %v1810 = vshrl.u32 %v1809, 7
  %v1811 = vsub.s32 %v1808, %v1810
  %v1812 = vrot.slane %v1798, %v1811
  %1815 = vst.msk [vmem:[#allocation2 + $0x7] sm:$0x1] %vm436, %v1805
  %1816 = vst.msk [vmem:[#allocation2 + $0xf] sm:$0x1] %vm436, %v1812
  %v1817 = vld [vmem:[#allocation2] sm:$0xff]
  %v1818 = vld [vmem:[#allocation2 + $0x8] sm:$0xff]
  %v1820 = vlaneseq
  %v1821 = vshrl.u32 %v1820, 7
  %v1822 = vsub.s32 0, %v1821
  %v1823 = vrot.slane %v132, %v1822
  %v1826 = vsel %vm241, %v1817, 0
  %v1829 = vsel %vm241, %v1818, 0
  %1831 = vmatprep.subr.mxu0 0.0
  %1832 = vmatpush1.msra.mxu0 %v131
  %1833 = vmatprep.subr.mxu0 0.0
  %1834 = vmatpush1.msra.mxu0 0.0
  %1835 = vmatprep.subr.mxu0 0.0
  %1836 = vmatpush1.msra.mxu0 0.0
  %1837 = vmatprep.subr.mxu0 0.0
  %1838 = vmatpush1.msra.mxu0 0.0
  %1839 = vmatprep.subr.mxu0 0.0
  %1840 = vmatpush1.msra.mxu0 0.0
  %1841 = vmatprep.subr.mxu0 0.0
  %1842 = vmatpush1.msra.mxu0 0.0
  %1843 = vmatprep.subr.mxu0 0.0
  %1844 = vmatpush1.msra.mxu0 0.0
  %1845 = vmatprep.subr.mxu0 0.0
  %1846 = vmatpush1.msra.mxu0 0.0
  %1847 = vmatprep.subr.mxu0 0.0
  %1848 = vmatpush1.msra.mxu0 0.0
  %1849 = vmatprep.subr.mxu0 0.0
  %1850 = vmatpush1.msra.mxu0 0.0
  %1851 = vmatprep.subr.mxu0 0.0
  %1852 = vmatpush1.msra.mxu0 0.0
  %1853 = vmatprep.subr.mxu0 0.0
  %1854 = vmatpush1.msra.mxu0 0.0
  %1855 = vmatprep.subr.mxu0 0.0
  %1856 = vmatpush1.msra.mxu0 0.0
  %1857 = vmatprep.subr.mxu0 0.0
  %1858 = vmatpush1.msra.mxu0 0.0
  %1859 = vmatprep.subr.mxu0 0.0
  %1860 = vmatpush1.msra.mxu0 0.0
  %1861 = vmatprep.subr.mxu0 0.0
  %1862 = vmatpush1.msra.mxu0 0.0
  %1863 = vmatprep.subr.mxu0 0.0
  %1864 = vmatpush1.msra.mxu0 0.0
  %1865 = vmatprep.subr.mxu0 0.0
  %1866 = vmatpush1.msra.mxu0 0.0
  %1867 = vmatprep.subr.mxu0 0.0
  %1868 = vmatpush1.msra.mxu0 0.0
  %1869 = vmatprep.subr.mxu0 0.0
  %1870 = vmatpush1.msra.mxu0 0.0
  %1871 = vmatprep.subr.mxu0 0.0
  %1872 = vmatpush1.msra.mxu0 0.0
  %1873 = vmatprep.subr.mxu0 0.0
  %1874 = vmatpush1.msra.mxu0 0.0
  %1875 = vmatprep.subr.mxu0 0.0
  %1876 = vmatpush1.msra.mxu0 0.0
  %1877 = vmatprep.subr.mxu0 0.0
  %1878 = vmatpush1.msra.mxu0 0.0
  %1879 = vmatprep.subr.mxu0 0.0
  %1880 = vmatpush1.msra.mxu0 0.0
  %1881 = vmatprep.subr.mxu0 0.0
  %1882 = vmatpush1.msra.mxu0 0.0
  %1883 = vmatprep.subr.mxu0 0.0
  %1884 = vmatpush1.msra.mxu0 0.0
  %1885 = vmatprep.subr.mxu0 0.0
  %1886 = vmatpush1.msra.mxu0 0.0
  %1887 = vmatprep.subr.mxu0 0.0
  %1888 = vmatpush1.msra.mxu0 0.0
  %1889 = vmatprep.subr.mxu0 0.0
  %1890 = vmatpush1.msra.mxu0 0.0
  %1891 = vmatprep.subr.mxu0 0.0
  %1892 = vmatpush1.msra.mxu0 0.0
  %1893 = vmatprep.subr.mxu0 0.0
  %1894 = vmatpush1.msra.mxu0 0.0
  %1895 = vmatprep.mubr.f32.mxu0 0.0
  %1896 = vmatmul.mubr.f32.gmra.mrb[0].mxu0 %v1826
  %v1897 = vpop.f32.mrb[0].mxu0
  %v1898 = vadd.f32 %v1823, %v1897
  %v1899 = vpop.f32.mrb[0].mxu0
  %1900 = vmatprep.mubr.f32.mxu0 0.0
  %1901 = vmatmul.mubr.f32.gmra.mrb[0].mxu0 %v1829
  %v1902 = vpop.f32.mrb[0].mxu0
  %v1903 = vadd.f32 %v1823, %v1902
  %v1904 = vpop.f32.mrb[0].mxu0
  %1905 = vdwg.mxu0
  %1906 = vst.msk [vmem:[%s12] sm:$0xff] %vm155, %v1898
  %1907 = vst.msk [vmem:[%s12 + $0x8] sm:$0xff] %vm155, %v1903
  // Predicated region
  $region50: #{model_forward.1} parent=0 // pred_check
    _
  $region51: #{model_forward.1} parent=0 // pred_check_branch
    %1909 = sbr.rel (0) target = $region53
  $region52: #{model_forward.1} parent=0 // pred_region
    _
  $region53: #{model_forward.1} parent=0 // pred_fallthru
    _
  // Predicated region
  $region54: #{model_forward.1} parent=0 // pred_check
    _
  $region55: #{model_forward.1} parent=0 // pred_check_branch
    %1911 = sbr.rel (0) target = $region57
  $region56: #{model_forward.1} parent=0 // pred_region
    _
  $region57: #{model_forward.1} parent=0 // pred_fallthru
    _

</llo_original>
